<compile_context>
chip_gen: v5e
topology: v5e:2x2
jax: 0.10.0
libtpu: 0.0.40
codegen_flags: <defaults>
</compile_context>

<pallas_src>
import functools

import jax
import jax.numpy as jnp
from jax.experimental import pallas as pl
from jax.experimental.pallas import tpu as pltpu

# --- module hyperparameters (from Transformer.__init__) ---
DIM = 32
HEAD_DIM_KQ = 32
HEAD_DIM_V = 32
N_HEADS = 8
MLP_DIM = 120
MLP_PAD = 128                                    # MLP width padded to a lane multiple
HEAD_DIM = 2 * HEAD_DIM_KQ + HEAD_DIM_V          # 96
INNER_DIM = N_HEADS * HEAD_DIM                   # 768


def transformer_kernel(x_ref,
                       wq_ref, wk_ref, wv_ref, bq_ref, bk_ref, bv_ref,
                       wback_ref, bback_ref, wh_ref, bh_ref, wo_ref, bo_ref,
                       out_ref, *, compute_dtype):
    """One batch element per grid step; full transformer layer in VMEM.

    Attention is batched over the leading head dim (like the flash-attention
    reference pattern): H * S * S logits, no mask, no iota, no dense (R,R) work.
    """
    S, D = x_ref.shape                      # leading batch dim of the block is squeezed
    H = wq_ref.shape[0]

    x2 = x_ref[...]                         # (S, D) float32 -- kept exact for residuals
    xc = x2.astype(compute_dtype)
    xh = jnp.broadcast_to(xc, (H, S, D))    # (H, S, D): one copy of x per head (tiny)

    # --- per-head q/k/v projections: three head-batched MXU matmuls.
    # Weights arrive pre-split as (H, D, 32); no unaligned lane slicing in-kernel.
    q = jnp.einsum('hsd,hde->hse', xh, wq_ref[...],
                   preferred_element_type=jnp.float32) + bq_ref[...]   # module's `qs`
    k = jnp.einsum('hsd,hde->hse', xh, wk_ref[...],
                   preferred_element_type=jnp.float32) + bk_ref[...]   # module's `ks`
    v = jnp.einsum('hsd,hde->hse', xh, wv_ref[...],
                   preferred_element_type=jnp.float32) + bv_ref[...]   # module's `vs`

    # --- attention (module semantics: logits = ks @ qs^T, softmax over the qs
    # axis, no 1/sqrt(d) scaling), batched over heads.
    logits = jnp.einsum('hid,hjd->hij',
                        k.astype(compute_dtype), q.astype(compute_dtype),
                        preferred_element_type=jnp.float32)            # (H, S, S)
    logits = logits - jnp.max(logits, axis=-1, keepdims=True)
    p = jnp.exp(logits)
    p = p * pl.reciprocal(jnp.sum(p, axis=-1, keepdims=True), approx=True)
    o = jnp.einsum('hij,hjd->hid',
                   p.astype(compute_dtype), v.astype(compute_dtype),
                   preferred_element_type=jnp.float32)                 # (H, S, 32)

    # --- back_to_dim with the head-concat folded in: wback pre-reshaped to
    # (H, 32, D), head-batched matmul + sum over the leading head dim.
    yh = jnp.einsum('hsd,hde->hse',
                    o.astype(compute_dtype), wback_ref[...],
                    preferred_element_type=jnp.float32)                # (H, S, D)
    y = jnp.sum(yh, axis=0) + bback_ref[...] + x2                      # residual 1

    # --- MLP (padded 120 -> 128 lanes with zeros; math is exact) + residual 2.
    # The reference module applies no activation between the two linears.
    hdn = jnp.dot(y.astype(compute_dtype), wh_ref[...],
                  preferred_element_type=jnp.float32) + bh_ref[...]    # (S, 128)
    out = jnp.dot(hdn.astype(compute_dtype), wo_ref[...],
                  preferred_element_type=jnp.float32) + bo_ref[...] + y

    out_ref[...] = out.astype(out_ref.dtype)


def _prepare_kernel_params(params, compute_dtype):
    """Re-layout the PyTorch-style parameters for the kernel:
       * to_qkv split per head / per projection -> (H, 32, 32) weights, (H, 1, 32) biases,
       * back_to_dim reshaped to (H, 32, 32) (folds the head concat),
       * MLP weights zero-padded 120 -> 128.
       Weights are cast to the matmul operand dtype; biases stay float32."""
    wqkv, bqkv, wback, bback, wh, bh, wo, bo = params
    H, hd, kq, hv = N_HEADS, HEAD_DIM, HEAD_DIM_KQ, HEAD_DIM_V

    def head_split(off, width):
        w = jnp.stack([wqkv[:, h * hd + off: h * hd + off + width]
                       for h in range(H)], axis=0)                    # (H, 32, width)
        b = jnp.stack([bqkv[:, h * hd + off: h * hd + off + width]
                       for h in range(H)], axis=0)                    # (H, 1, width)
        return w, b

    wq, bq = head_split(0, kq)                 # module's `qs` columns
    wk, bk = head_split(kq, kq)                # module's `ks` columns
    wv, bv = head_split(2 * kq, hv)            # module's `vs` columns

    wback3 = wback.reshape(H, hv, DIM)         # rows are (head, feature) -> exact fold

    pad = MLP_PAD - MLP_DIM
    wh_p = jnp.pad(wh, ((0, 0), (0, pad)))
    bh_p = jnp.pad(bh, ((0, 0), (0, pad)))
    wo_p = jnp.pad(wo, ((0, pad), (0, 0)))     # zero rows -> padded lanes contribute 0

    cast = lambda w: w.astype(compute_dtype)
    f32 = lambda b: b.astype(jnp.float32)
    return (cast(wq), cast(wk), cast(wv), f32(bq), f32(bk), f32(bv),
            cast(wback3), f32(bback), cast(wh_p), f32(bh_p), cast(wo_p), f32(bo))


@functools.partial(jax.jit, static_argnames=("compute_dtype",))
def transformer_forward(x, params, *, compute_dtype=jnp.float32):
    B, S, D = x.shape
    assert D == DIM
    kparams = _prepare_kernel_params(params, compute_dtype)

    def resident(arr):
        # Whole (tiny, <100 KiB total) weight resident in VMEM for every grid step.
        nd = arr.ndim
        return pl.BlockSpec(arr.shape, lambda b: (0,) * nd)

    out = pl.pallas_call(
        functools.partial(transformer_kernel, compute_dtype=compute_dtype),
        out_shape=jax.ShapeDtypeStruct((B, S, D), jnp.float32),
        grid_spec=pltpu.PrefetchScalarGridSpec(
            num_scalar_prefetch=0,
            grid=(B,),                                   # one batch element per step
            in_specs=[pl.BlockSpec((None, S, D), lambda b: (b, 0, 0))]
                     + [resident(p) for p in kparams],
            out_specs=pl.BlockSpec((None, S, D), lambda b: (b, 0, 0)),
        ),
        compiler_params=pltpu.CompilerParams(
            dimension_semantics=("parallel",),           # batch steps are independent
            vmem_limit_bytes=32 * 1024 * 1024,           # explicit, not the scoped default
        ),
    )(x, *kparams)
    return out


def _default_compute_dtype():
    """bf16 matmul operands (f32 accumulation) on v6e/v7x; f32 on v5e / unknown."""
    try:
        kind = jax.devices()[0].device_kind.lower()
    except Exception:
        return jnp.float32
    if "v6" in kind or "v7" in kind or "7x" in kind:
        return jnp.bfloat16
    return jnp.float32


def init_params(key):
    """Deterministic parameter init. Weights stored (in, out); biases (1, out)."""
    ks = jax.random.split(key, 8)

    def lin(kw, kb, fan_in, fan_out):
        limit = (6.0 / (fan_in + fan_out)) ** 0.5
        w = jax.random.uniform(kw, (fan_in, fan_out), jnp.float32, -limit, limit)
        b = jax.random.uniform(kb, (1, fan_out), jnp.float32, -0.1, 0.1)
        return w, b

    wqkv, bqkv = lin(ks[0], ks[1], DIM, INNER_DIM)
    wback, bback = lin(ks[2], ks[3], N_HEADS * HEAD_DIM_V, DIM)
    wh, bh = lin(ks[4], ks[5], DIM, MLP_DIM)
    wo, bo = lin(ks[6], ks[7], MLP_DIM, DIM)
    return (wqkv, bqkv, wback, bback, wh, bh, wo, bo)


def reference_forward(x, params):
    """Pure-JAX reference mirroring the PyTorch forward (dropout = identity)."""
    wqkv, bqkv, wback, bback, wh, bh, wo, bo = params
    frozen = x
    qkv = x @ wqkv + bqkv
    heads = []
    for h in range(N_HEADS):
        ko = h * HEAD_DIM
        qo = ko + HEAD_DIM_KQ
        vo = ko + 2 * HEAD_DIM_KQ
        qs = qkv[:, :, ko:ko + HEAD_DIM_KQ]
        ksl = qkv[:, :, qo:qo + HEAD_DIM_KQ]
        vs = qkv[:, :, vo:vo + HEAD_DIM_V]
        attn = jnp.einsum('bsk,btk->bst', ksl, qs)
        attn = jax.nn.softmax(attn, axis=2)
        heads.append(jnp.einsum('bst,btv->bsv', attn, vs))
    stacked = jnp.concatenate(heads, axis=2)
    y = stacked @ wback + bback + frozen
    frozen = y
    out = (y @ wh + bh) @ wo + bo + frozen
    return out


if __name__ == "__main__":
    key = jax.random.PRNGKey(0)
    k_x, k_p = jax.random.split(key)

    B, S = 2, 8
    x = jax.random.normal(k_x, (B, S, DIM), jnp.float32)
    params = init_params(k_p)

    compute_dtype = _default_compute_dtype()
    out = transformer_forward(x, params, compute_dtype=compute_dtype)
    out = jax.block_until_ready(out)

    ref = reference_forward(x, params)
    assert out.shape == (B, S, DIM)
    # f32 path: only the EUP approximate-reciprocal softmax differs (~1e-3 rel).
    # bf16 path: matmul operands are rounded to bf16 (accumulation stays f32).
    tol = 3e-2 if compute_dtype == jnp.bfloat16 else 2e-3
    assert jnp.allclose(out, ref, atol=tol, rtol=tol), "mismatch vs JAX reference"

    # TODO(synk): nn.Dropout layers are identity here (inference semantics); no RNG mask applied.
    print("KERNEL_OK")
</pallas_src>

<mosaic_0001>
module attributes {stable_mosaic.version = 11 : i64} {
  func.func @transformer_kernel(%arg0: i32, %arg1: memref<1x8x32xf32, #tpu.memory_space<vmem>>, %arg2: memref<8x32x32xf32, #tpu.memory_space<vmem>>, %arg3: memref<8x32x32xf32, #tpu.memory_space<vmem>>, %arg4: memref<8x32x32xf32, #tpu.memory_space<vmem>>, %arg5: memref<8x1x32xf32, #tpu.memory_space<vmem>>, %arg6: memref<8x1x32xf32, #tpu.memory_space<vmem>>, %arg7: memref<8x1x32xf32, #tpu.memory_space<vmem>>, %arg8: memref<8x32x32xf32, #tpu.memory_space<vmem>>, %arg9: memref<1x32xf32, #tpu.memory_space<vmem>>, %arg10: memref<32x128xf32, #tpu.memory_space<vmem>>, %arg11: memref<1x128xf32, #tpu.memory_space<vmem>>, %arg12: memref<128x32xf32, #tpu.memory_space<vmem>>, %arg13: memref<1x32xf32, #tpu.memory_space<vmem>>, %arg14: memref<1x8x32xf32, #tpu.memory_space<vmem>>) attributes {dimension_semantics = [#tpu.dimension_semantics<parallel>], iteration_bounds = array<i64: 2>, scalar_prefetch = 0 : i64, scratch_operands = 0 : i64, tpu.core_type = #tpu.core_type<tc>, window_params = [{transform_indices = @transform_0, window_bounds = array<i64: 1, 8, 32>}, {pipeline_mode = #tpu.pipeline_mode<synchronous>, transform_indices = @transform_1, window_bounds = array<i64: 8, 32, 32>}, {pipeline_mode = #tpu.pipeline_mode<synchronous>, transform_indices = @transform_2, window_bounds = array<i64: 8, 32, 32>}, {pipeline_mode = #tpu.pipeline_mode<synchronous>, transform_indices = @transform_3, window_bounds = array<i64: 8, 32, 32>}, {pipeline_mode = #tpu.pipeline_mode<synchronous>, transform_indices = @transform_4, window_bounds = array<i64: 8, 1, 32>}, {pipeline_mode = #tpu.pipeline_mode<synchronous>, transform_indices = @transform_5, window_bounds = array<i64: 8, 1, 32>}, {pipeline_mode = #tpu.pipeline_mode<synchronous>, transform_indices = @transform_6, window_bounds = array<i64: 8, 1, 32>}, {pipeline_mode = #tpu.pipeline_mode<synchronous>, transform_indices = @transform_7, window_bounds = array<i64: 8, 32, 32>}, {pipeline_mode = #tpu.pipeline_mode<synchronous>, transform_indices = @transform_8, window_bounds = array<i64: 1, 32>}, {pipeline_mode = #tpu.pipeline_mode<synchronous>, transform_indices = @transform_9, window_bounds = array<i64: 32, 128>}, {pipeline_mode = #tpu.pipeline_mode<synchronous>, transform_indices = @transform_10, window_bounds = array<i64: 1, 128>}, {pipeline_mode = #tpu.pipeline_mode<synchronous>, transform_indices = @transform_11, window_bounds = array<i64: 128, 32>}, {pipeline_mode = #tpu.pipeline_mode<synchronous>, transform_indices = @transform_12, window_bounds = array<i64: 1, 32>}, {transform_indices = @transform_13, window_bounds = array<i64: 1, 8, 32>}]} {
    %c0 = arith.constant 0 : index
    %c0_0 = arith.constant 0 : index
    %c0_1 = arith.constant 0 : index
    %0 = vector.load %arg1[%c0, %c0_0, %c0_1] : memref<1x8x32xf32, #tpu.memory_space<vmem>>, vector<1x8x32xf32>
    %1 = vector.shape_cast %0 : vector<1x8x32xf32> to vector<8x32xf32>
    %2 = vector.shape_cast %1 : vector<8x32xf32> to vector<1x8x32xf32>
    %3 = vector.broadcast %2 : vector<1x8x32xf32> to vector<8x8x32xf32>
    %c0_2 = arith.constant 0 : index
    %c0_3 = arith.constant 0 : index
    %c0_4 = arith.constant 0 : index
    %4 = vector.load %arg2[%c0_2, %c0_3, %c0_4] : memref<8x32x32xf32, #tpu.memory_space<vmem>>, vector<8x32x32xf32>
    "tpu.trace_start"() <{level = 10 : i32, message = "hsd,hde->hse"}> : () -> ()
    %cst = arith.constant dense<0.000000e+00> : vector<8x8x32xf32>
    %5 = tpu.matmul %3, %4, %cst {dimension_numbers = #tpu.dot_dimension_numbers<[2], [1], [1], [2], [0, 0, 0, 1, 1, 2], [0], [0]>} : vector<8x8x32xf32>, vector<8x32x32xf32>, vector<8x8x32xf32> -> vector<8x8x32xf32>
    "tpu.trace_stop"() : () -> ()
    %c0_5 = arith.constant 0 : index
    %c0_6 = arith.constant 0 : index
    %c0_7 = arith.constant 0 : index
    %6 = vector.load %arg5[%c0_5, %c0_6, %c0_7] : memref<8x1x32xf32, #tpu.memory_space<vmem>>, vector<8x1x32xf32>
    %7 = vector.broadcast %6 : vector<8x1x32xf32> to vector<8x8x32xf32>
    %8 = arith.addf %5, %7 : vector<8x8x32xf32>
    %c0_8 = arith.constant 0 : index
    %c0_9 = arith.constant 0 : index
    %c0_10 = arith.constant 0 : index
    %9 = vector.load %arg3[%c0_8, %c0_9, %c0_10] : memref<8x32x32xf32, #tpu.memory_space<vmem>>, vector<8x32x32xf32>
    "tpu.trace_start"() <{level = 10 : i32, message = "hsd,hde->hse"}> : () -> ()
    %cst_11 = arith.constant dense<0.000000e+00> : vector<8x8x32xf32>
    %10 = tpu.matmul %3, %9, %cst_11 {dimension_numbers = #tpu.dot_dimension_numbers<[2], [1], [1], [2], [0, 0, 0, 1, 1, 2], [0], [0]>} : vector<8x8x32xf32>, vector<8x32x32xf32>, vector<8x8x32xf32> -> vector<8x8x32xf32>
    "tpu.trace_stop"() : () -> ()
    %c0_12 = arith.constant 0 : index
    %c0_13 = arith.constant 0 : index
    %c0_14 = arith.constant 0 : index
    %11 = vector.load %arg6[%c0_12, %c0_13, %c0_14] : memref<8x1x32xf32, #tpu.memory_space<vmem>>, vector<8x1x32xf32>
    %12 = vector.broadcast %11 : vector<8x1x32xf32> to vector<8x8x32xf32>
    %13 = arith.addf %10, %12 : vector<8x8x32xf32>
    %c0_15 = arith.constant 0 : index
    %c0_16 = arith.constant 0 : index
    %c0_17 = arith.constant 0 : index
    %14 = vector.load %arg4[%c0_15, %c0_16, %c0_17] : memref<8x32x32xf32, #tpu.memory_space<vmem>>, vector<8x32x32xf32>
    "tpu.trace_start"() <{level = 10 : i32, message = "hsd,hde->hse"}> : () -> ()
    %cst_18 = arith.constant dense<0.000000e+00> : vector<8x8x32xf32>
    %15 = tpu.matmul %3, %14, %cst_18 {dimension_numbers = #tpu.dot_dimension_numbers<[2], [1], [1], [2], [0, 0, 0, 1, 1, 2], [0], [0]>} : vector<8x8x32xf32>, vector<8x32x32xf32>, vector<8x8x32xf32> -> vector<8x8x32xf32>
    "tpu.trace_stop"() : () -> ()
    %c0_19 = arith.constant 0 : index
    %c0_20 = arith.constant 0 : index
    %c0_21 = arith.constant 0 : index
    %16 = vector.load %arg7[%c0_19, %c0_20, %c0_21] : memref<8x1x32xf32, #tpu.memory_space<vmem>>, vector<8x1x32xf32>
    %17 = vector.broadcast %16 : vector<8x1x32xf32> to vector<8x8x32xf32>
    %18 = arith.addf %15, %17 : vector<8x8x32xf32>
    "tpu.trace_start"() <{level = 10 : i32, message = "hid,hjd->hij"}> : () -> ()
    %cst_22 = arith.constant dense<0.000000e+00> : vector<8x8x8xf32>
    %19 = tpu.matmul %13, %8, %cst_22 {dimension_numbers = #tpu.dot_dimension_numbers<[2], [2], [1], [1], [0, 0, 0, 1, 1, 1], [0], [0]>} : vector<8x8x32xf32>, vector<8x8x32xf32>, vector<8x8x8xf32> -> vector<8x8x8xf32>
    "tpu.trace_stop"() : () -> ()
    %cst_23 = arith.constant dense<0xFF800000> : vector<8x8xf32>
    %20 = vector.multi_reduction <maximumf>, %19, %cst_23 [2] : vector<8x8x8xf32> to vector<8x8xf32>
    %21 = vector.shape_cast %20 : vector<8x8xf32> to vector<8x8x1xf32>
    %22 = vector.broadcast %21 : vector<8x8x1xf32> to vector<8x8x8xf32>
    %23 = arith.subf %19, %22 : vector<8x8x8xf32>
    %24 = math.exp %23 : vector<8x8x8xf32>
    %cst_24 = arith.constant dense<0.000000e+00> : vector<8x8xf32>
    %25 = vector.multi_reduction <add>, %24, %cst_24 [2] : vector<8x8x8xf32> to vector<8x8xf32>
    %26 = vector.shape_cast %25 : vector<8x8xf32> to vector<8x8x1xf32>
    %27 = tpu.reciprocal %26 {approx = true} : vector<8x8x1xf32> -> vector<8x8x1xf32>
    %28 = vector.broadcast %27 : vector<8x8x1xf32> to vector<8x8x8xf32>
    %29 = arith.mulf %24, %28 : vector<8x8x8xf32>
    "tpu.trace_start"() <{level = 10 : i32, message = "hij,hjd->hid"}> : () -> ()
    %cst_25 = arith.constant dense<0.000000e+00> : vector<8x8x32xf32>
    %30 = tpu.matmul %29, %18, %cst_25 {dimension_numbers = #tpu.dot_dimension_numbers<[2], [1], [1], [2], [0, 0, 0, 1, 1, 2], [0], [0]>} : vector<8x8x8xf32>, vector<8x8x32xf32>, vector<8x8x32xf32> -> vector<8x8x32xf32>
    "tpu.trace_stop"() : () -> ()
    %c0_26 = arith.constant 0 : index
    %c0_27 = arith.constant 0 : index
    %c0_28 = arith.constant 0 : index
    %31 = vector.load %arg8[%c0_26, %c0_27, %c0_28] : memref<8x32x32xf32, #tpu.memory_space<vmem>>, vector<8x32x32xf32>
    "tpu.trace_start"() <{level = 10 : i32, message = "hsd,hde->hse"}> : () -> ()
    %cst_29 = arith.constant dense<0.000000e+00> : vector<8x8x32xf32>
    %32 = tpu.matmul %30, %31, %cst_29 {dimension_numbers = #tpu.dot_dimension_numbers<[2], [1], [1], [2], [0, 0, 0, 1, 1, 2], [0], [0]>} : vector<8x8x32xf32>, vector<8x32x32xf32>, vector<8x8x32xf32> -> vector<8x8x32xf32>
    "tpu.trace_stop"() : () -> ()
    %cst_30 = arith.constant dense<0.000000e+00> : vector<8x32xf32>
    %33 = vector.multi_reduction <add>, %32, %cst_30 [0] : vector<8x8x32xf32> to vector<8x32xf32>
    %c0_31 = arith.constant 0 : index
    %c0_32 = arith.constant 0 : index
    %34 = vector.load %arg9[%c0_31, %c0_32] : memref<1x32xf32, #tpu.memory_space<vmem>>, vector<1x32xf32>
    %35 = vector.broadcast %34 : vector<1x32xf32> to vector<8x32xf32>
    %36 = arith.addf %33, %35 : vector<8x32xf32>
    %37 = arith.addf %36, %1 : vector<8x32xf32>
    %c0_33 = arith.constant 0 : index
    %c0_34 = arith.constant 0 : index
    %38 = vector.load %arg10[%c0_33, %c0_34] : memref<32x128xf32, #tpu.memory_space<vmem>>, vector<32x128xf32>
    %cst_35 = arith.constant dense<0.000000e+00> : vector<8x128xf32>
    %39 = tpu.matmul %37, %38, %cst_35 {dimension_numbers = #tpu.dot_dimension_numbers<[1], [0], [0], [1], [0, 0, 1, 1], [], []>} : vector<8x32xf32>, vector<32x128xf32>, vector<8x128xf32> -> vector<8x128xf32>
    %c0_36 = arith.constant 0 : index
    %c0_37 = arith.constant 0 : index
    %40 = vector.load %arg11[%c0_36, %c0_37] : memref<1x128xf32, #tpu.memory_space<vmem>>, vector<1x128xf32>
    %41 = vector.broadcast %40 : vector<1x128xf32> to vector<8x128xf32>
    %42 = arith.addf %39, %41 : vector<8x128xf32>
    %c0_38 = arith.constant 0 : index
    %c0_39 = arith.constant 0 : index
    %43 = vector.load %arg12[%c0_38, %c0_39] : memref<128x32xf32, #tpu.memory_space<vmem>>, vector<128x32xf32>
    %cst_40 = arith.constant dense<0.000000e+00> : vector<8x32xf32>
    %44 = tpu.matmul %42, %43, %cst_40 {dimension_numbers = #tpu.dot_dimension_numbers<[1], [0], [0], [1], [0, 0, 1, 1], [], []>} : vector<8x128xf32>, vector<128x32xf32>, vector<8x32xf32> -> vector<8x32xf32>
    %c0_41 = arith.constant 0 : index
    %c0_42 = arith.constant 0 : index
    %45 = vector.load %arg13[%c0_41, %c0_42] : memref<1x32xf32, #tpu.memory_space<vmem>>, vector<1x32xf32>
    %46 = vector.broadcast %45 : vector<1x32xf32> to vector<8x32xf32>
    %47 = arith.addf %44, %46 : vector<8x32xf32>
    %48 = arith.addf %47, %37 : vector<8x32xf32>
    %c0_43 = arith.constant 0 : index
    %c0_44 = arith.constant 0 : index
    %c0_45 = arith.constant 0 : index
    %49 = vector.load %arg14[%c0_43, %c0_44, %c0_45] : memref<1x8x32xf32, #tpu.memory_space<vmem>>, vector<1x8x32xf32>
    %50 = vector.shape_cast %49 : vector<1x8x32xf32> to vector<8x32xf32>
    %51 = vector.shape_cast %48 : vector<8x32xf32> to vector<1x8x32xf32>
    tpu.vector_store %arg14[%c0_43, %c0_44, %c0_45], %51 {strides = array<i32>} : memref<1x8x32xf32, #tpu.memory_space<vmem>>, vector<1x8x32xf32>,
    return
  }
  func.func @transform_0(%arg0: i32) -> (i32, i32, i32) {
    %c0_i32 = arith.constant 0 : i32
    %c0_i32_0 = arith.constant 0 : i32
    %c0_i32_1 = arith.constant 0 : i32
    return %arg0, %c0_i32, %c0_i32_0 : i32, i32, i32
  }
  func.func @transform_1(%arg0: i32) -> (i32, i32, i32) {
    %c0_i32 = arith.constant 0 : i32
    %c0_i32_0 = arith.constant 0 : i32
    %c0_i32_1 = arith.constant 0 : i32
    %c0_i32_2 = arith.constant 0 : i32
    return %c0_i32, %c0_i32_0, %c0_i32_1 : i32, i32, i32
  }
  func.func @transform_2(%arg0: i32) -> (i32, i32, i32) {
    %c0_i32 = arith.constant 0 : i32
    %c0_i32_0 = arith.constant 0 : i32
    %c0_i32_1 = arith.constant 0 : i32
    %c0_i32_2 = arith.constant 0 : i32
    return %c0_i32, %c0_i32_0, %c0_i32_1 : i32, i32, i32
  }
  func.func @transform_3(%arg0: i32) -> (i32, i32, i32) {
    %c0_i32 = arith.constant 0 : i32
    %c0_i32_0 = arith.constant 0 : i32
    %c0_i32_1 = arith.constant 0 : i32
    %c0_i32_2 = arith.constant 0 : i32
    return %c0_i32, %c0_i32_0, %c0_i32_1 : i32, i32, i32
  }
  func.func @transform_4(%arg0: i32) -> (i32, i32, i32) {
    %c0_i32 = arith.constant 0 : i32
    %c0_i32_0 = arith.constant 0 : i32
    %c0_i32_1 = arith.constant 0 : i32
    %c0_i32_2 = arith.constant 0 : i32
    return %c0_i32, %c0_i32_0, %c0_i32_1 : i32, i32, i32
  }
  func.func @transform_5(%arg0: i32) -> (i32, i32, i32) {
    %c0_i32 = arith.constant 0 : i32
    %c0_i32_0 = arith.constant 0 : i32
    %c0_i32_1 = arith.constant 0 : i32
    %c0_i32_2 = arith.constant 0 : i32
    return %c0_i32, %c0_i32_0, %c0_i32_1 : i32, i32, i32
  }
  func.func @transform_6(%arg0: i32) -> (i32, i32, i32) {
    %c0_i32 = arith.constant 0 : i32
    %c0_i32_0 = arith.constant 0 : i32
    %c0_i32_1 = arith.constant 0 : i32
    %c0_i32_2 = arith.constant 0 : i32
    return %c0_i32, %c0_i32_0, %c0_i32_1 : i32, i32, i32
  }
  func.func @transform_7(%arg0: i32) -> (i32, i32, i32) {
    %c0_i32 = arith.constant 0 : i32
    %c0_i32_0 = arith.constant 0 : i32
    %c0_i32_1 = arith.constant 0 : i32
    %c0_i32_2 = arith.constant 0 : i32
    return %c0_i32, %c0_i32_0, %c0_i32_1 : i32, i32, i32
  }
  func.func @transform_8(%arg0: i32) -> (i32, i32) {
    %c0_i32 = arith.constant 0 : i32
    %c0_i32_0 = arith.constant 0 : i32
    %c0_i32_1 = arith.constant 0 : i32
    return %c0_i32, %c0_i32_0 : i32, i32
  }
  func.func @transform_9(%arg0: i32) -> (i32, i32) {
    %c0_i32 = arith.constant 0 : i32
    %c0_i32_0 = arith.constant 0 : i32
    %c0_i32_1 = arith.constant 0 : i32
    return %c0_i32, %c0_i32_0 : i32, i32
  }
  func.func @transform_10(%arg0: i32) -> (i32, i32) {
    %c0_i32 = arith.constant 0 : i32
    %c0_i32_0 = arith.constant 0 : i32
    %c0_i32_1 = arith.constant 0 : i32
    return %c0_i32, %c0_i32_0 : i32, i32
  }
  func.func @transform_11(%arg0: i32) -> (i32, i32) {
    %c0_i32 = arith.constant 0 : i32
    %c0_i32_0 = arith.constant 0 : i32
    %c0_i32_1 = arith.constant 0 : i32
    return %c0_i32, %c0_i32_0 : i32, i32
  }
  func.func @transform_12(%arg0: i32) -> (i32, i32) {
    %c0_i32 = arith.constant 0 : i32
    %c0_i32_0 = arith.constant 0 : i32
    %c0_i32_1 = arith.constant 0 : i32
    return %c0_i32, %c0_i32_0 : i32, i32
  }
  func.func @transform_13(%arg0: i32) -> (i32, i32, i32) {
    %c0_i32 = arith.constant 0 : i32
    %c0_i32_0 = arith.constant 0 : i32
    %c0_i32_1 = arith.constant 0 : i32
    return %arg0, %c0_i32, %c0_i32_0 : i32, i32, i32
  }
}

</mosaic_0001>

<llo_original>
// kernel: transformer_forward.1
$region0: #{transformer_forward.1}
  #allocation0 [shape = 'u32[]', space=smem, size = 0x4, offset = 0x4, fixed_abs, tag = 'smem constant byte address 0x4 - core index']
  #allocation1 [shape = 'u32[72,128]{1,0:T(1,128)}', space=vmem, size = 0x9000, scoped, tag = 'internal scratch']
  %s0 = inlined_call_operand.vmem [shape: f32[2,8,32], index: 0, kind: input, shape index: {}]
  %s1 = inlined_call_operand.vmem [shape: f32[8,32,32], index: 1, kind: input, shape index: {}]
  %s2 = inlined_call_operand.vmem [shape: f32[8,32,32], index: 2, kind: input, shape index: {}]
  %s3 = inlined_call_operand.vmem [shape: f32[8,32,32], index: 3, kind: input, shape index: {}]
  %s4 = inlined_call_operand.vmem [shape: f32[8,1,32], index: 4, kind: input, shape index: {}]
  %s5 = inlined_call_operand.vmem [shape: f32[8,1,32], index: 5, kind: input, shape index: {}]
  %s6 = inlined_call_operand.vmem [shape: f32[8,1,32], index: 6, kind: input, shape index: {}]
  %s7 = inlined_call_operand.vmem [shape: f32[8,32,32], index: 7, kind: input, shape index: {}]
  %s8 = inlined_call_operand.vmem [shape: f32[1,32], index: 8, kind: input, shape index: {}]
  %s9 = inlined_call_operand.vmem [shape: f32[32,128], index: 9, kind: input, shape index: {}]
  %s10 = inlined_call_operand.vmem [shape: f32[1,128], index: 10, kind: input, shape index: {}]
  %s11 = inlined_call_operand.vmem [shape: f32[128,32], index: 11, kind: input, shape index: {}]
  %s12 = inlined_call_operand.vmem [shape: f32[1,32], index: 12, kind: input, shape index: {}]
  %s13 = inlined_call_operand.hbm [shape: f32[2,8,32], index: 13, kind: output, shape index: {}]
  %s14 = sld [smem:[#allocation0]]
  $region85: #{transformer_forward.1} parent=0
    _
  %s16 = ssub.s32 1, %s14
  %s17 = scalar_select 0, %s16, %s14
  $region1: #{transformer_forward.1} parent=0
    #allocation2 [shape = 'u8[8192]{0}', space=vmem, size = 0x2000, scoped, tag = 'output window, operand 0']
    #allocation3 [shape = 's32[2]{0}', space=sflag, size = 0x8, scoped, tag = 'scoped memory for transformer_forward.1']
    %18 = vsyncpa [#allocation3], 0
    %s19 = scalar_lea.sflag [#allocation3], 1
    %20 = vsyncpa %s19, 0
    loop: start=0, step=1, limit=4
    $region2: #{transformer_forward.1} parent=1 // loop_pre_header
      _
    $region3: #{transformer_forward.1} parent=1 // loop_header
      %s22 = sphi 0, %s26
      %p23 = scmp.ge.s32.totalorder %s22, 4
      %s32 = sphi 0, %s34
      %s35 = sphi 0, %s32
      %s36 = sphi 0, %s35
      %s52 = sphi 0, %s36
      %s56 = sphi 0, %s56
      %s58 = sphi 0, %s56
      %s59 = sphi 0, %s58
      %s73 = sphi 0, %s59
      %s77 = sphi 0, %s77
      %s79 = sphi 0, %s77
      %s80 = sphi 0, %s79
      %s94 = sphi 0, %s80
      %s98 = sphi 0, %s98
      %s100 = sphi 0, %s98
      %s101 = sphi 0, %s100
      %s115 = sphi 0, %s101
      %s119 = sphi 0, %s119
      %s121 = sphi 0, %s119
      %s122 = sphi 0, %s121
      %s136 = sphi 0, %s122
      %s140 = sphi 0, %s140
      %s142 = sphi 0, %s140
      %s143 = sphi 0, %s142
      %s157 = sphi 0, %s143
      %s161 = sphi 0, %s161
      %s163 = sphi 0, %s161
      %s164 = sphi 0, %s163
      %s178 = sphi 0, %s164
      %s182 = sphi 0, %s182
      %s184 = sphi 0, %s182
      %s185 = sphi 0, %s184
      %s199 = sphi 0, %s185
      %s203 = sphi 0, %s203
      %s205 = sphi 0, %s203
      %s206 = sphi 0, %s205
      %s220 = sphi 0, %s206
      %s224 = sphi 0, %s224
      %s226 = sphi 0, %s224
      %s227 = sphi 0, %s226
      %s241 = sphi 0, %s227
      %s245 = sphi 0, %s245
      %s247 = sphi 0, %s245
      %s248 = sphi 0, %s247
      %s262 = sphi 0, %s248
      %s266 = sphi 0, %s266
      %s268 = sphi 0, %s266
      %s269 = sphi 0, %s268
      %s283 = sphi 0, %s269
      %s287 = sphi 0, %s287
      %s289 = sphi 0, %s287
      %s290 = sphi 0, %s289
      %s304 = sphi 0, %s290
      %s310 = sphi 0, %s312
      %s313 = sphi 0, %s310
      %s314 = sphi 0, %s313
      %s330 = sphi 0, %s314
    $region4: #{transformer_forward.1} parent=1 // loop_header_branch
      %25 = sbr.rel (%p23) target = $region8
    $region5: #{transformer_forward.1} parent=1 // loop_body
      %s27 = ssub.s32 %s22, 1
      %s28 = ssub.s32 %s22, 2
      %s29 = sadd.s32 %s22, 1
      %s30 = ssub.s32 %s22, %s29
      %p31 = scmp.eq.s32.totalorder %s30, 0
      %s33 = sadd.s32 %s32, 1
      %s34 = scalar_select %p31, %s32, %s33
      %p37 = pneg %p31
      %p38 = scmp.eq.s32.totalorder %s22, 1
      %p39 = por %p37, %p38
      %p40 = scmp.ne.s32.totalorder %s32, %s35
      %p41 = scmp.eq.s32.totalorder %s22, 0
      %p42 = por %p40, %p41
      %p43 = scmp.ne.s32.totalorder %s32, %s35
      %p44 = scmp.eq.s32.totalorder %s27, 1
      %p45 = por %p43, %p44
      %p46 = scmp.ne.s32.totalorder %s35, %s36
      %p47 = scmp.eq.s32.totalorder %s27, 0
      %p48 = por %p46, %p47
      %p49 = scmp.ne.s32.totalorder %s35, %s36
      %p50 = scmp.eq.s32.totalorder %s28, 1
      %p51 = por %p49, %p50
      %p53 = scmp.ne.s32.totalorder %s36, %s52
      %p54 = scmp.eq.s32.totalorder %s28, 0
      %p55 = por %p53, %p54
      %s57 = sadd.s32 %s56, 1
      %p60 = scmp.eq.s32.totalorder %s22, 1
      %p61 = scmp.ne.s32.totalorder %s56, %s58
      %p62 = scmp.eq.s32.totalorder %s22, 0
      %p63 = por %p61, %p62
      %p64 = scmp.ne.s32.totalorder %s56, %s58
      %p65 = scmp.eq.s32.totalorder %s27, 1
      %p66 = por %p64, %p65
      %p67 = scmp.ne.s32.totalorder %s58, %s59
      %p68 = scmp.eq.s32.totalorder %s27, 0
      %p69 = por %p67, %p68
      %p70 = scmp.ne.s32.totalorder %s58, %s59
      %p71 = scmp.eq.s32.totalorder %s28, 1
      %p72 = por %p70, %p71
      %p74 = scmp.ne.s32.totalorder %s59, %s73
      %p75 = scmp.eq.s32.totalorder %s28, 0
      %p76 = por %p74, %p75
      %s78 = sadd.s32 %s77, 1
      %p81 = scmp.eq.s32.totalorder %s22, 1
      %p82 = scmp.ne.s32.totalorder %s77, %s79
      %p83 = scmp.eq.s32.totalorder %s22, 0
      %p84 = por %p82, %p83
      %p85 = scmp.ne.s32.totalorder %s77, %s79
      %p86 = scmp.eq.s32.totalorder %s27, 1
      %p87 = por %p85, %p86
      %p88 = scmp.ne.s32.totalorder %s79, %s80
      %p89 = scmp.eq.s32.totalorder %s27, 0
      %p90 = por %p88, %p89
      %p91 = scmp.ne.s32.totalorder %s79, %s80
      %p92 = scmp.eq.s32.totalorder %s28, 1
      %p93 = por %p91, %p92
      %p95 = scmp.ne.s32.totalorder %s80, %s94
      %p96 = scmp.eq.s32.totalorder %s28, 0
      %p97 = por %p95, %p96
      %s99 = sadd.s32 %s98, 1
      %p102 = scmp.eq.s32.totalorder %s22, 1
      %p103 = scmp.ne.s32.totalorder %s98, %s100
      %p104 = scmp.eq.s32.totalorder %s22, 0
      %p105 = por %p103, %p104
      %p106 = scmp.ne.s32.totalorder %s98, %s100
      %p107 = scmp.eq.s32.totalorder %s27, 1
      %p108 = por %p106, %p107
      %p109 = scmp.ne.s32.totalorder %s100, %s101
      %p110 = scmp.eq.s32.totalorder %s27, 0
      %p111 = por %p109, %p110
      %p112 = scmp.ne.s32.totalorder %s100, %s101
      %p113 = scmp.eq.s32.totalorder %s28, 1
      %p114 = por %p112, %p113
      %p116 = scmp.ne.s32.totalorder %s101, %s115
      %p117 = scmp.eq.s32.totalorder %s28, 0
      %p118 = por %p116, %p117
      %s120 = sadd.s32 %s119, 1
      %p123 = scmp.eq.s32.totalorder %s22, 1
      %p124 = scmp.ne.s32.totalorder %s119, %s121
      %p125 = scmp.eq.s32.totalorder %s22, 0
      %p126 = por %p124, %p125
      %p127 = scmp.ne.s32.totalorder %s119, %s121
      %p128 = scmp.eq.s32.totalorder %s27, 1
      %p129 = por %p127, %p128
      %p130 = scmp.ne.s32.totalorder %s121, %s122
      %p131 = scmp.eq.s32.totalorder %s27, 0
      %p132 = por %p130, %p131
      %p133 = scmp.ne.s32.totalorder %s121, %s122
      %p134 = scmp.eq.s32.totalorder %s28, 1
      %p135 = por %p133, %p134
      %p137 = scmp.ne.s32.totalorder %s122, %s136
      %p138 = scmp.eq.s32.totalorder %s28, 0
      %p139 = por %p137, %p138
      %s141 = sadd.s32 %s140, 1
      %p144 = scmp.eq.s32.totalorder %s22, 1
      %p145 = scmp.ne.s32.totalorder %s140, %s142
      %p146 = scmp.eq.s32.totalorder %s22, 0
      %p147 = por %p145, %p146
      %p148 = scmp.ne.s32.totalorder %s140, %s142
      %p149 = scmp.eq.s32.totalorder %s27, 1
      %p150 = por %p148, %p149
      %p151 = scmp.ne.s32.totalorder %s142, %s143
      %p152 = scmp.eq.s32.totalorder %s27, 0
      %p153 = por %p151, %p152
      %p154 = scmp.ne.s32.totalorder %s142, %s143
      %p155 = scmp.eq.s32.totalorder %s28, 1
      %p156 = por %p154, %p155
      %p158 = scmp.ne.s32.totalorder %s143, %s157
      %p159 = scmp.eq.s32.totalorder %s28, 0
      %p160 = por %p158, %p159
      %s162 = sadd.s32 %s161, 1
      %p165 = scmp.eq.s32.totalorder %s22, 1
      %p166 = scmp.ne.s32.totalorder %s161, %s163
      %p167 = scmp.eq.s32.totalorder %s22, 0
      %p168 = por %p166, %p167
      %p169 = scmp.ne.s32.totalorder %s161, %s163
      %p170 = scmp.eq.s32.totalorder %s27, 1
      %p171 = por %p169, %p170
      %p172 = scmp.ne.s32.totalorder %s163, %s164
      %p173 = scmp.eq.s32.totalorder %s27, 0
      %p174 = por %p172, %p173
      %p175 = scmp.ne.s32.totalorder %s163, %s164
      %p176 = scmp.eq.s32.totalorder %s28, 1
      %p177 = por %p175, %p176
      %p179 = scmp.ne.s32.totalorder %s164, %s178
      %p180 = scmp.eq.s32.totalorder %s28, 0
      %p181 = por %p179, %p180
      %s183 = sadd.s32 %s182, 1
      %p186 = scmp.eq.s32.totalorder %s22, 1
      %p187 = scmp.ne.s32.totalorder %s182, %s184
      %p188 = scmp.eq.s32.totalorder %s22, 0
      %p189 = por %p187, %p188
      %p190 = scmp.ne.s32.totalorder %s182, %s184
      %p191 = scmp.eq.s32.totalorder %s27, 1
      %p192 = por %p190, %p191
      %p193 = scmp.ne.s32.totalorder %s184, %s185
      %p194 = scmp.eq.s32.totalorder %s27, 0
      %p195 = por %p193, %p194
      %p196 = scmp.ne.s32.totalorder %s184, %s185
      %p197 = scmp.eq.s32.totalorder %s28, 1
      %p198 = por %p196, %p197
      %p200 = scmp.ne.s32.totalorder %s185, %s199
      %p201 = scmp.eq.s32.totalorder %s28, 0
      %p202 = por %p200, %p201
      %s204 = sadd.s32 %s203, 1
      %p207 = scmp.eq.s32.totalorder %s22, 1
      %p208 = scmp.ne.s32.totalorder %s203, %s205
      %p209 = scmp.eq.s32.totalorder %s22, 0
      %p210 = por %p208, %p209
      %p211 = scmp.ne.s32.totalorder %s203, %s205
      %p212 = scmp.eq.s32.totalorder %s27, 1
      %p213 = por %p211, %p212
      %p214 = scmp.ne.s32.totalorder %s205, %s206
      %p215 = scmp.eq.s32.totalorder %s27, 0
      %p216 = por %p214, %p215
      %p217 = scmp.ne.s32.totalorder %s205, %s206
      %p218 = scmp.eq.s32.totalorder %s28, 1
      %p219 = por %p217, %p218
      %p221 = scmp.ne.s32.totalorder %s206, %s220
      %p222 = scmp.eq.s32.totalorder %s28, 0
      %p223 = por %p221, %p222
      %s225 = sadd.s32 %s224, 1
      %p228 = scmp.eq.s32.totalorder %s22, 1
      %p229 = scmp.ne.s32.totalorder %s224, %s226
      %p230 = scmp.eq.s32.totalorder %s22, 0
      %p231 = por %p229, %p230
      %p232 = scmp.ne.s32.totalorder %s224, %s226
      %p233 = scmp.eq.s32.totalorder %s27, 1
      %p234 = por %p232, %p233
      %p235 = scmp.ne.s32.totalorder %s226, %s227
      %p236 = scmp.eq.s32.totalorder %s27, 0
      %p237 = por %p235, %p236
      %p238 = scmp.ne.s32.totalorder %s226, %s227
      %p239 = scmp.eq.s32.totalorder %s28, 1
      %p240 = por %p238, %p239
      %p242 = scmp.ne.s32.totalorder %s227, %s241
      %p243 = scmp.eq.s32.totalorder %s28, 0
      %p244 = por %p242, %p243
      %s246 = sadd.s32 %s245, 1
      %p249 = scmp.eq.s32.totalorder %s22, 1
      %p250 = scmp.ne.s32.totalorder %s245, %s247
      %p251 = scmp.eq.s32.totalorder %s22, 0
      %p252 = por %p250, %p251
      %p253 = scmp.ne.s32.totalorder %s245, %s247
      %p254 = scmp.eq.s32.totalorder %s27, 1
      %p255 = por %p253, %p254
      %p256 = scmp.ne.s32.totalorder %s247, %s248
      %p257 = scmp.eq.s32.totalorder %s27, 0
      %p258 = por %p256, %p257
      %p259 = scmp.ne.s32.totalorder %s247, %s248
      %p260 = scmp.eq.s32.totalorder %s28, 1
      %p261 = por %p259, %p260
      %p263 = scmp.ne.s32.totalorder %s248, %s262
      %p264 = scmp.eq.s32.totalorder %s28, 0
      %p265 = por %p263, %p264
      %s267 = sadd.s32 %s266, 1
      %p270 = scmp.eq.s32.totalorder %s22, 1
      %p271 = scmp.ne.s32.totalorder %s266, %s268
      %p272 = scmp.eq.s32.totalorder %s22, 0
      %p273 = por %p271, %p272
      %p274 = scmp.ne.s32.totalorder %s266, %s268
      %p275 = scmp.eq.s32.totalorder %s27, 1
      %p276 = por %p274, %p275
      %p277 = scmp.ne.s32.totalorder %s268, %s269
      %p278 = scmp.eq.s32.totalorder %s27, 0
      %p279 = por %p277, %p278
      %p280 = scmp.ne.s32.totalorder %s268, %s269
      %p281 = scmp.eq.s32.totalorder %s28, 1
      %p282 = por %p280, %p281
      %p284 = scmp.ne.s32.totalorder %s269, %s283
      %p285 = scmp.eq.s32.totalorder %s28, 0
      %p286 = por %p284, %p285
      %s288 = sadd.s32 %s287, 1
      %p291 = scmp.eq.s32.totalorder %s22, 1
      %p292 = scmp.ne.s32.totalorder %s287, %s289
      %p293 = scmp.eq.s32.totalorder %s22, 0
      %p294 = por %p292, %p293
      %p295 = scmp.ne.s32.totalorder %s287, %s289
      %p296 = scmp.eq.s32.totalorder %s27, 1
      %p297 = por %p295, %p296
      %p298 = scmp.ne.s32.totalorder %s289, %s290
      %p299 = scmp.eq.s32.totalorder %s27, 0
      %p300 = por %p298, %p299
      %p301 = scmp.ne.s32.totalorder %s289, %s290
      %p302 = scmp.eq.s32.totalorder %s28, 1
      %p303 = por %p301, %p302
      %p305 = scmp.ne.s32.totalorder %s290, %s304
      %p306 = scmp.eq.s32.totalorder %s28, 0
      %p307 = por %p305, %p306
      %s308 = ssub.s32 %s22, %s29
      %p309 = scmp.eq.s32.totalorder %s308, 0
      %s311 = sadd.s32 %s310, 1
      %s312 = scalar_select %p309, %s310, %s311
      %p315 = pneg %p309
      %p316 = scmp.eq.s32.totalorder %s22, 1
      %p317 = por %p315, %p316
      %p318 = scmp.ne.s32.totalorder %s310, %s313
      %p319 = scmp.eq.s32.totalorder %s22, 0
      %p320 = por %p318, %p319
      %p321 = scmp.ne.s32.totalorder %s310, %s313
      %p322 = scmp.eq.s32.totalorder %s27, 1
      %p323 = por %p321, %p322
      %p324 = scmp.ne.s32.totalorder %s313, %s314
      %p325 = scmp.eq.s32.totalorder %s27, 0
      %p326 = por %p324, %p325
      %p327 = scmp.ne.s32.totalorder %s313, %s314
      %p328 = scmp.eq.s32.totalorder %s28, 1
      %p329 = por %p327, %p328
      %p331 = scmp.ne.s32.totalorder %s314, %s330
      %p332 = scmp.eq.s32.totalorder %s28, 0
      %p333 = por %p331, %p332
      %p334 = scmp.le.s32.totalorder 1, %s22
      %p335 = scmp.lt.s32.totalorder %s22, 3
      %p336 = pnand %p334, %p335
      %p337 = pneg %p336
      // Predicated region
      $region9: #{transformer_forward.1} parent=5 // pred_check
        _
      $region10: #{transformer_forward.1} parent=5 // pred_check_branch
        %339 = sbr.rel (%p336) target = $region12
      $region11: #{transformer_forward.1} parent=5 // pred_region
        %s340 = ssub.s32 %s22, 1
        // Predicated region
        $region13: #{transformer_forward.1} parent=11 // pred_check
          %p341 = pneg %p69
        $region14: #{transformer_forward.1} parent=11 // pred_check_branch
          %343 = sbr.rel (%p341) target = $region16
        $region15: #{transformer_forward.1} parent=11 // pred_region
          _
        $region16: #{transformer_forward.1} parent=11 // pred_fallthru
          _
        // Predicated region
        $region17: #{transformer_forward.1} parent=11 // pred_check
          %p344 = pneg %p90
        $region18: #{transformer_forward.1} parent=11 // pred_check_branch
          %346 = sbr.rel (%p344) target = $region20
        $region19: #{transformer_forward.1} parent=11 // pred_region
          _
        $region20: #{transformer_forward.1} parent=11 // pred_fallthru
          _
        // Predicated region
        $region21: #{transformer_forward.1} parent=11 // pred_check
          %p347 = pneg %p111
        $region22: #{transformer_forward.1} parent=11 // pred_check_branch
          %349 = sbr.rel (%p347) target = $region24
        $region23: #{transformer_forward.1} parent=11 // pred_region
          _
        $region24: #{transformer_forward.1} parent=11 // pred_fallthru
          _
        // Predicated region
        $region25: #{transformer_forward.1} parent=11 // pred_check
          %p350 = pneg %p132
        $region26: #{transformer_forward.1} parent=11 // pred_check_branch
          %352 = sbr.rel (%p350) target = $region28
        $region27: #{transformer_forward.1} parent=11 // pred_region
          _
        $region28: #{transformer_forward.1} parent=11 // pred_fallthru
          _
        // Predicated region
        $region29: #{transformer_forward.1} parent=11 // pred_check
          %p353 = pneg %p153
        $region30: #{transformer_forward.1} parent=11 // pred_check_branch
          %355 = sbr.rel (%p353) target = $region32
        $region31: #{transformer_forward.1} parent=11 // pred_region
          _
        $region32: #{transformer_forward.1} parent=11 // pred_fallthru
          _
        // Predicated region
        $region33: #{transformer_forward.1} parent=11 // pred_check
          %p356 = pneg %p174
        $region34: #{transformer_forward.1} parent=11 // pred_check_branch
          %358 = sbr.rel (%p356) target = $region36
        $region35: #{transformer_forward.1} parent=11 // pred_region
          _
        $region36: #{transformer_forward.1} parent=11 // pred_fallthru
          _
        // Predicated region
        $region37: #{transformer_forward.1} parent=11 // pred_check
          %p359 = pneg %p195
        $region38: #{transformer_forward.1} parent=11 // pred_check_branch
          %361 = sbr.rel (%p359) target = $region40
        $region39: #{transformer_forward.1} parent=11 // pred_region
          _
        $region40: #{transformer_forward.1} parent=11 // pred_fallthru
          _
        // Predicated region
        $region41: #{transformer_forward.1} parent=11 // pred_check
          %p362 = pneg %p216
        $region42: #{transformer_forward.1} parent=11 // pred_check_branch
          %364 = sbr.rel (%p362) target = $region44
        $region43: #{transformer_forward.1} parent=11 // pred_region
          _
        $region44: #{transformer_forward.1} parent=11 // pred_fallthru
          _
        // Predicated region
        $region45: #{transformer_forward.1} parent=11 // pred_check
          %p365 = pneg %p237
        $region46: #{transformer_forward.1} parent=11 // pred_check_branch
          %367 = sbr.rel (%p365) target = $region48
        $region47: #{transformer_forward.1} parent=11 // pred_region
          _
        $region48: #{transformer_forward.1} parent=11 // pred_fallthru
          _
        // Predicated region
        $region49: #{transformer_forward.1} parent=11 // pred_check
          %p368 = pneg %p258
        $region50: #{transformer_forward.1} parent=11 // pred_check_branch
          %370 = sbr.rel (%p368) target = $region52
        $region51: #{transformer_forward.1} parent=11 // pred_region
          _
        $region52: #{transformer_forward.1} parent=11 // pred_fallthru
          _
        // Predicated region
        $region53: #{transformer_forward.1} parent=11 // pred_check
          %p371 = pneg %p279
        $region54: #{transformer_forward.1} parent=11 // pred_check_branch
          %373 = sbr.rel (%p371) target = $region56
        $region55: #{transformer_forward.1} parent=11 // pred_region
          _
        $region56: #{transformer_forward.1} parent=11 // pred_fallthru
          _
        // Predicated region
        $region57: #{transformer_forward.1} parent=11 // pred_check
          %p374 = pneg %p300
        $region58: #{transformer_forward.1} parent=11 // pred_check_branch
          %376 = sbr.rel (%p374) target = $region60
        $region59: #{transformer_forward.1} parent=11 // pred_region
          _
        $region60: #{transformer_forward.1} parent=11 // pred_fallthru
          _
      $region12: #{transformer_forward.1} parent=5 // pred_fallthru
        _
      %p377 = scmp.lt.s32.totalorder %s22, 2
      // Predicated region
      $region61: #{transformer_forward.1} parent=5 // pred_check
        %p378 = pneg %p377
      $region62: #{transformer_forward.1} parent=5 // pred_check_branch
        %380 = sbr.rel (%p378) target = $region64
      $region63: #{transformer_forward.1} parent=5 // pred_region
        // Predicated region
        $region65: #{transformer_forward.1} parent=63 // pred_check
          %p381 = pneg %p42
        $region66: #{transformer_forward.1} parent=63 // pred_check_branch
          %383 = sbr.rel (%p381) target = $region68
        $region67: #{transformer_forward.1} parent=63 // pred_region
          %p384 = scmp.lt.s32.totalorder %s22, 1
          %s385 = scalar_select %p384, %s22, 1
          %s386 = smul.addr %s385, 8
          %s387 = scalar_lea.vmem %s0, %s386
        $region68: #{transformer_forward.1} parent=63 // pred_fallthru
          _
      $region64: #{transformer_forward.1} parent=5 // pred_fallthru
        _
      %p388 = scmp.le.s32.totalorder 1, %s22
      %p389 = scmp.lt.s32.totalorder %s22, 3
      %p390 = pnand %p388, %p389
      %p391 = pneg %p390
      // Predicated region
      $region69: #{transformer_forward.1} parent=5 // pred_check
        _
      $region70: #{transformer_forward.1} parent=5 // pred_check_branch
        %393 = sbr.rel (%p390) target = $region72
      $region71: #{transformer_forward.1} parent=5 // pred_region
        %s394 = ssub.s32 %s22, 1
        %p395 = scmp.lt.s32.totalorder %s27, 1
        %s396 = scalar_select %p395, %s27, 1
        %s397 = smul.addr %s396, 8
        %s398 = scalar_lea.vmem %s0, %s397
        %p399 = pneg %p48
        %p400 = pneg %p45
        %p401 = pneg %p69
        %p402 = pneg %p66
        %p403 = pneg %p90
        %p404 = pneg %p87
        %p405 = pneg %p111
        %p406 = pneg %p108
        %p407 = pneg %p132
        %p408 = pneg %p129
        %p409 = pneg %p153
        %p410 = pneg %p150
        %p411 = pneg %p174
        %p412 = pneg %p171
        %p413 = pneg %p195
        %p414 = pneg %p192
        %p415 = pneg %p216
        %p416 = pneg %p213
        %p417 = pneg %p237
        %p418 = pneg %p234
        %p419 = pneg %p258
        %p420 = pneg %p255
        %p421 = pneg %p279
        %p422 = pneg %p276
        %p423 = pneg %p300
        %p424 = pneg %p297
        %p425 = pneg %p326
        %p426 = pneg %p323
        %s427 = sand.u32 %s313, 1
        %s428 = scalar_lea.sflag [#allocation3], %s427
        %s429 = sand.u32 %s313, 1
        %s430 = smul.addr %s429, 8
        %s431 = scalar_lea.vmem [#allocation2], %s430
        %p432 = scmp.lt.s32.totalorder %s27, 1
        %s433 = scalar_select %p432, %s27, 1
        %s434 = smul.addr %s433, 8
        %s435 = scalar_lea.vmem %s0, %s434
        %v436 = vld [vmem:[%s435] sm:$0xff]
        %v437 = vld [vmem:[%s1] sm:$0xff]
        %v438 = vld [vmem:[%s1 + $0x8] sm:$0xff]
        %v439 = vld [vmem:[%s1 + $0x10] sm:$0xff]
        %v440 = vld [vmem:[%s1 + $0x18] sm:$0xff]
        %v441 = vld [vmem:[%s1 + $0x20] sm:$0xff]
        %v442 = vld [vmem:[%s1 + $0x28] sm:$0xff]
        %v443 = vld [vmem:[%s1 + $0x30] sm:$0xff]
        %v444 = vld [vmem:[%s1 + $0x38] sm:$0xff]
        %v445 = vld [vmem:[%s1 + $0x40] sm:$0xff]
        %v446 = vld [vmem:[%s1 + $0x48] sm:$0xff]
        %v447 = vld [vmem:[%s1 + $0x50] sm:$0xff]
        %v448 = vld [vmem:[%s1 + $0x58] sm:$0xff]
        %v449 = vld [vmem:[%s1 + $0x60] sm:$0xff]
        %v450 = vld [vmem:[%s1 + $0x68] sm:$0xff]
        %v451 = vld [vmem:[%s1 + $0x70] sm:$0xff]
        %v452 = vld [vmem:[%s1 + $0x78] sm:$0xff]
        %v453 = vld [vmem:[%s1 + $0x80] sm:$0xff]
        %v454 = vld [vmem:[%s1 + $0x88] sm:$0xff]
        %v455 = vld [vmem:[%s1 + $0x90] sm:$0xff]
        %v456 = vld [vmem:[%s1 + $0x98] sm:$0xff]
        %v457 = vld [vmem:[%s1 + $0xa0] sm:$0xff]
        %v458 = vld [vmem:[%s1 + $0xa8] sm:$0xff]
        %v459 = vld [vmem:[%s1 + $0xb0] sm:$0xff]
        %v460 = vld [vmem:[%s1 + $0xb8] sm:$0xff]
        %v461 = vld [vmem:[%s1 + $0xc0] sm:$0xff]
        %v462 = vld [vmem:[%s1 + $0xc8] sm:$0xff]
        %v463 = vld [vmem:[%s1 + $0xd0] sm:$0xff]
        %v464 = vld [vmem:[%s1 + $0xd8] sm:$0xff]
        %v465 = vld [vmem:[%s1 + $0xe0] sm:$0xff]
        %v466 = vld [vmem:[%s1 + $0xe8] sm:$0xff]
        %v467 = vld [vmem:[%s1 + $0xf0] sm:$0xff]
        %v468 = vld [vmem:[%s1 + $0xf8] sm:$0xff]
        %v469 = vld [vmem:[%s4] sm:$0x1]
        %v470 = vld [vmem:[%s4 + $0x1] sm:$0x1]
        %v471 = vld [vmem:[%s4 + $0x2] sm:$0x1]
        %v472 = vld [vmem:[%s4 + $0x3] sm:$0x1]
        %v473 = vld [vmem:[%s4 + $0x4] sm:$0x1]
        %v474 = vld [vmem:[%s4 + $0x5] sm:$0x1]
        %v475 = vld [vmem:[%s4 + $0x6] sm:$0x1]
        %v476 = vld [vmem:[%s4 + $0x7] sm:$0x1]
        %v485 = vperm.slane %v469, 0
        %v486 = vperm.slane %v470, 0
        %v487 = vperm.slane %v471, 0
        %v488 = vperm.slane %v472, 0
        %v489 = vperm.slane %v473, 0
        %v490 = vperm.slane %v474, 0
        %v491 = vperm.slane %v475, 0
        %v492 = vperm.slane %v476, 0
        %vm501 = vcmask 261120
        %v503 = vsel %vm501, %v436, 0
        %505 = vmatpush.msra.mxu0 0.0
        %506 = vmatpush.msra.mxu0 0.0
        %507 = vmatpush.msra.mxu0 0.0
        %508 = vmatpush.msra.mxu0 0.0
        %509 = vmatpush.msra.mxu0 0.0
        %510 = vmatpush.msra.mxu0 0.0
        %511 = vmatpush.msra.mxu0 0.0
        %512 = vmatpush.msra.mxu0 0.0
        %513 = vmatpush.msra.mxu0 0.0
        %514 = vmatpush.msra.mxu0 0.0
        %515 = vmatpush.msra.mxu0 0.0
        %516 = vmatpush.msra.mxu0 0.0
        %517 = vmatpush.msra.mxu0 %v440
        %518 = vmatpush.msra.mxu0 %v439
        %519 = vmatpush.msra.mxu0 %v438
        %520 = vmatpush.msra.mxu0 %v437
        %521 = vmatmul.f32.gmra.mxu0 %v503
        %v522 = vpop.f32.mrf.mxu0
        %v523 = vadd.f32 %v485, %v522
        %524 = vdwg.mxu0
        %525 = vmatpush.msra.mxu0 0.0
        %526 = vmatpush.msra.mxu0 0.0
        %527 = vmatpush.msra.mxu0 0.0
        %528 = vmatpush.msra.mxu0 0.0
        %529 = vmatpush.msra.mxu0 0.0
        %530 = vmatpush.msra.mxu0 0.0
        %531 = vmatpush.msra.mxu0 0.0
        %532 = vmatpush.msra.mxu0 0.0
        %533 = vmatpush.msra.mxu0 0.0
        %534 = vmatpush.msra.mxu0 0.0
        %535 = vmatpush.msra.mxu0 0.0
        %536 = vmatpush.msra.mxu0 0.0
        %537 = vmatpush.msra.mxu0 %v444
        %538 = vmatpush.msra.mxu0 %v443
        %539 = vmatpush.msra.mxu0 %v442
        %540 = vmatpush.msra.mxu0 %v441
        %541 = vmatmul.f32.gmra.mxu0 %v503
        %v542 = vpop.f32.mrf.mxu0
        %v543 = vadd.f32 %v486, %v542
        %544 = vdwg.mxu0
        %545 = vmatpush.msra.mxu0 0.0
        %546 = vmatpush.msra.mxu0 0.0
        %547 = vmatpush.msra.mxu0 0.0
        %548 = vmatpush.msra.mxu0 0.0
        %549 = vmatpush.msra.mxu0 0.0
        %550 = vmatpush.msra.mxu0 0.0
        %551 = vmatpush.msra.mxu0 0.0
        %552 = vmatpush.msra.mxu0 0.0
        %553 = vmatpush.msra.mxu0 0.0
        %554 = vmatpush.msra.mxu0 0.0
        %555 = vmatpush.msra.mxu0 0.0
        %556 = vmatpush.msra.mxu0 0.0
        %557 = vmatpush.msra.mxu0 %v448
        %558 = vmatpush.msra.mxu0 %v447
        %559 = vmatpush.msra.mxu0 %v446
        %560 = vmatpush.msra.mxu0 %v445
        %561 = vmatmul.f32.gmra.mxu0 %v503
        %v562 = vpop.f32.mrf.mxu0
        %v563 = vadd.f32 %v487, %v562
        %564 = vdwg.mxu0
        %565 = vmatpush.msra.mxu0 0.0
        %566 = vmatpush.msra.mxu0 0.0
        %567 = vmatpush.msra.mxu0 0.0
        %568 = vmatpush.msra.mxu0 0.0
        %569 = vmatpush.msra.mxu0 0.0
        %570 = vmatpush.msra.mxu0 0.0
        %571 = vmatpush.msra.mxu0 0.0
        %572 = vmatpush.msra.mxu0 0.0
        %573 = vmatpush.msra.mxu0 0.0
        %574 = vmatpush.msra.mxu0 0.0
        %575 = vmatpush.msra.mxu0 0.0
        %576 = vmatpush.msra.mxu0 0.0
        %577 = vmatpush.msra.mxu0 %v452
        %578 = vmatpush.msra.mxu0 %v451
        %579 = vmatpush.msra.mxu0 %v450
        %580 = vmatpush.msra.mxu0 %v449
        %581 = vmatmul.f32.gmra.mxu0 %v503
        %v582 = vpop.f32.mrf.mxu0
        %v583 = vadd.f32 %v488, %v582
        %584 = vdwg.mxu0
        %585 = vmatpush.msra.mxu0 0.0
        %586 = vmatpush.msra.mxu0 0.0
        %587 = vmatpush.msra.mxu0 0.0
        %588 = vmatpush.msra.mxu0 0.0
        %589 = vmatpush.msra.mxu0 0.0
        %590 = vmatpush.msra.mxu0 0.0
        %591 = vmatpush.msra.mxu0 0.0
        %592 = vmatpush.msra.mxu0 0.0
        %593 = vmatpush.msra.mxu0 0.0
        %594 = vmatpush.msra.mxu0 0.0
        %595 = vmatpush.msra.mxu0 0.0
        %596 = vmatpush.msra.mxu0 0.0
        %597 = vmatpush.msra.mxu0 %v456
        %598 = vmatpush.msra.mxu0 %v455
        %599 = vmatpush.msra.mxu0 %v454
        %600 = vmatpush.msra.mxu0 %v453
        %601 = vmatmul.f32.gmra.mxu0 %v503
        %v602 = vpop.f32.mrf.mxu0
        %v603 = vadd.f32 %v489, %v602
        %604 = vdwg.mxu0
        %605 = vmatpush.msra.mxu0 0.0
        %606 = vmatpush.msra.mxu0 0.0
        %607 = vmatpush.msra.mxu0 0.0
        %608 = vmatpush.msra.mxu0 0.0
        %609 = vmatpush.msra.mxu0 0.0
        %610 = vmatpush.msra.mxu0 0.0
        %611 = vmatpush.msra.mxu0 0.0
        %612 = vmatpush.msra.mxu0 0.0
        %613 = vmatpush.msra.mxu0 0.0
        %614 = vmatpush.msra.mxu0 0.0
        %615 = vmatpush.msra.mxu0 0.0
        %616 = vmatpush.msra.mxu0 0.0
        %617 = vmatpush.msra.mxu0 %v460
        %618 = vmatpush.msra.mxu0 %v459
        %619 = vmatpush.msra.mxu0 %v458
        %620 = vmatpush.msra.mxu0 %v457
        %621 = vmatmul.f32.gmra.mxu0 %v503
        %v622 = vpop.f32.mrf.mxu0
        %v623 = vadd.f32 %v490, %v622
        %624 = vdwg.mxu0
        %625 = vmatpush.msra.mxu0 0.0
        %626 = vmatpush.msra.mxu0 0.0
        %627 = vmatpush.msra.mxu0 0.0
        %628 = vmatpush.msra.mxu0 0.0
        %629 = vmatpush.msra.mxu0 0.0
        %630 = vmatpush.msra.mxu0 0.0
        %631 = vmatpush.msra.mxu0 0.0
        %632 = vmatpush.msra.mxu0 0.0
        %633 = vmatpush.msra.mxu0 0.0
        %634 = vmatpush.msra.mxu0 0.0
        %635 = vmatpush.msra.mxu0 0.0
        %636 = vmatpush.msra.mxu0 0.0
        %637 = vmatpush.msra.mxu0 %v464
        %638 = vmatpush.msra.mxu0 %v463
        %639 = vmatpush.msra.mxu0 %v462
        %640 = vmatpush.msra.mxu0 %v461
        %641 = vmatmul.f32.gmra.mxu0 %v503
        %v642 = vpop.f32.mrf.mxu0
        %v643 = vadd.f32 %v491, %v642
        %644 = vdwg.mxu0
        %645 = vmatpush.msra.mxu0 0.0
        %646 = vmatpush.msra.mxu0 0.0
        %647 = vmatpush.msra.mxu0 0.0
        %648 = vmatpush.msra.mxu0 0.0
        %649 = vmatpush.msra.mxu0 0.0
        %650 = vmatpush.msra.mxu0 0.0
        %651 = vmatpush.msra.mxu0 0.0
        %652 = vmatpush.msra.mxu0 0.0
        %653 = vmatpush.msra.mxu0 0.0
        %654 = vmatpush.msra.mxu0 0.0
        %655 = vmatpush.msra.mxu0 0.0
        %656 = vmatpush.msra.mxu0 0.0
        %657 = vmatpush.msra.mxu0 %v468
        %658 = vmatpush.msra.mxu0 %v467
        %659 = vmatpush.msra.mxu0 %v466
        %660 = vmatpush.msra.mxu0 %v465
        %661 = vmatmul.f32.gmra.mxu0 %v503
        %v662 = vpop.f32.mrf.mxu0
        %v663 = vadd.f32 %v492, %v662
        %664 = vdwg.mxu0
        %v665 = vld [vmem:[%s2] sm:$0xff]
        %v666 = vld [vmem:[%s2 + $0x8] sm:$0xff]
        %v667 = vld [vmem:[%s2 + $0x10] sm:$0xff]
        %v668 = vld [vmem:[%s2 + $0x18] sm:$0xff]
        %v669 = vld [vmem:[%s2 + $0x20] sm:$0xff]
        %v670 = vld [vmem:[%s2 + $0x28] sm:$0xff]
        %v671 = vld [vmem:[%s2 + $0x30] sm:$0xff]
        %v672 = vld [vmem:[%s2 + $0x38] sm:$0xff]
        %v673 = vld [vmem:[%s2 + $0x40] sm:$0xff]
        %v674 = vld [vmem:[%s2 + $0x48] sm:$0xff]
        %v675 = vld [vmem:[%s2 + $0x50] sm:$0xff]
        %v676 = vld [vmem:[%s2 + $0x58] sm:$0xff]
        %v677 = vld [vmem:[%s2 + $0x60] sm:$0xff]
        %v678 = vld [vmem:[%s2 + $0x68] sm:$0xff]
        %v679 = vld [vmem:[%s2 + $0x70] sm:$0xff]
        %v680 = vld [vmem:[%s2 + $0x78] sm:$0xff]
        %v681 = vld [vmem:[%s2 + $0x80] sm:$0xff]
        %v682 = vld [vmem:[%s2 + $0x88] sm:$0xff]
        %v683 = vld [vmem:[%s2 + $0x90] sm:$0xff]
        %v684 = vld [vmem:[%s2 + $0x98] sm:$0xff]
        %v685 = vld [vmem:[%s2 + $0xa0] sm:$0xff]
        %v686 = vld [vmem:[%s2 + $0xa8] sm:$0xff]
        %v687 = vld [vmem:[%s2 + $0xb0] sm:$0xff]
        %v688 = vld [vmem:[%s2 + $0xb8] sm:$0xff]
        %v689 = vld [vmem:[%s2 + $0xc0] sm:$0xff]
        %v690 = vld [vmem:[%s2 + $0xc8] sm:$0xff]
        %v691 = vld [vmem:[%s2 + $0xd0] sm:$0xff]
        %v692 = vld [vmem:[%s2 + $0xd8] sm:$0xff]
        %v693 = vld [vmem:[%s2 + $0xe0] sm:$0xff]
        %v694 = vld [vmem:[%s2 + $0xe8] sm:$0xff]
        %v695 = vld [vmem:[%s2 + $0xf0] sm:$0xff]
        %v696 = vld [vmem:[%s2 + $0xf8] sm:$0xff]
        %v697 = vld [vmem:[%s5] sm:$0x1]
        %v698 = vld [vmem:[%s5 + $0x1] sm:$0x1]
        %v699 = vld [vmem:[%s5 + $0x2] sm:$0x1]
        %v700 = vld [vmem:[%s5 + $0x3] sm:$0x1]
        %v701 = vld [vmem:[%s5 + $0x4] sm:$0x1]
        %v702 = vld [vmem:[%s5 + $0x5] sm:$0x1]
        %v703 = vld [vmem:[%s5 + $0x6] sm:$0x1]
        %v704 = vld [vmem:[%s5 + $0x7] sm:$0x1]
        %v713 = vperm.slane %v697, 0
        %v714 = vperm.slane %v698, 0
        %v715 = vperm.slane %v699, 0
        %v716 = vperm.slane %v700, 0
        %v717 = vperm.slane %v701, 0
        %v718 = vperm.slane %v702, 0
        %v719 = vperm.slane %v703, 0
        %v720 = vperm.slane %v704, 0
        %729 = vmatpush.msra.mxu0 0.0
        %730 = vmatpush.msra.mxu0 0.0
        %731 = vmatpush.msra.mxu0 0.0
        %732 = vmatpush.msra.mxu0 0.0
        %733 = vmatpush.msra.mxu0 0.0
        %734 = vmatpush.msra.mxu0 0.0
        %735 = vmatpush.msra.mxu0 0.0
        %736 = vmatpush.msra.mxu0 0.0
        %737 = vmatpush.msra.mxu0 0.0
        %738 = vmatpush.msra.mxu0 0.0
        %739 = vmatpush.msra.mxu0 0.0
        %740 = vmatpush.msra.mxu0 0.0
        %741 = vmatpush.msra.mxu0 %v668
        %742 = vmatpush.msra.mxu0 %v667
        %743 = vmatpush.msra.mxu0 %v666
        %744 = vmatpush.msra.mxu0 %v665
        %745 = vmatmul.f32.gmra.mxu0 %v503
        %v746 = vpop.f32.mrf.mxu0
        %v747 = vadd.f32 %v713, %v746
        %748 = vdwg.mxu0
        %749 = vmatpush.msra.mxu0 0.0
        %750 = vmatpush.msra.mxu0 0.0
        %751 = vmatpush.msra.mxu0 0.0
        %752 = vmatpush.msra.mxu0 0.0
        %753 = vmatpush.msra.mxu0 0.0
        %754 = vmatpush.msra.mxu0 0.0
        %755 = vmatpush.msra.mxu0 0.0
        %756 = vmatpush.msra.mxu0 0.0
        %757 = vmatpush.msra.mxu0 0.0
        %758 = vmatpush.msra.mxu0 0.0
        %759 = vmatpush.msra.mxu0 0.0
        %760 = vmatpush.msra.mxu0 0.0
        %761 = vmatpush.msra.mxu0 %v672
        %762 = vmatpush.msra.mxu0 %v671
        %763 = vmatpush.msra.mxu0 %v670
        %764 = vmatpush.msra.mxu0 %v669
        %765 = vmatmul.f32.gmra.mxu0 %v503
        %v766 = vpop.f32.mrf.mxu0
        %v767 = vadd.f32 %v714, %v766
        %768 = vdwg.mxu0
        %769 = vmatpush.msra.mxu0 0.0
        %770 = vmatpush.msra.mxu0 0.0
        %771 = vmatpush.msra.mxu0 0.0
        %772 = vmatpush.msra.mxu0 0.0
        %773 = vmatpush.msra.mxu0 0.0
        %774 = vmatpush.msra.mxu0 0.0
        %775 = vmatpush.msra.mxu0 0.0
        %776 = vmatpush.msra.mxu0 0.0
        %777 = vmatpush.msra.mxu0 0.0
        %778 = vmatpush.msra.mxu0 0.0
        %779 = vmatpush.msra.mxu0 0.0
        %780 = vmatpush.msra.mxu0 0.0
        %781 = vmatpush.msra.mxu0 %v676
        %782 = vmatpush.msra.mxu0 %v675
        %783 = vmatpush.msra.mxu0 %v674
        %784 = vmatpush.msra.mxu0 %v673
        %785 = vmatmul.f32.gmra.mxu0 %v503
        %v786 = vpop.f32.mrf.mxu0
        %v787 = vadd.f32 %v715, %v786
        %788 = vdwg.mxu0
        %789 = vmatpush.msra.mxu0 0.0
        %790 = vmatpush.msra.mxu0 0.0
        %791 = vmatpush.msra.mxu0 0.0
        %792 = vmatpush.msra.mxu0 0.0
        %793 = vmatpush.msra.mxu0 0.0
        %794 = vmatpush.msra.mxu0 0.0
        %795 = vmatpush.msra.mxu0 0.0
        %796 = vmatpush.msra.mxu0 0.0
        %797 = vmatpush.msra.mxu0 0.0
        %798 = vmatpush.msra.mxu0 0.0
        %799 = vmatpush.msra.mxu0 0.0
        %800 = vmatpush.msra.mxu0 0.0
        %801 = vmatpush.msra.mxu0 %v680
        %802 = vmatpush.msra.mxu0 %v679
        %803 = vmatpush.msra.mxu0 %v678
        %804 = vmatpush.msra.mxu0 %v677
        %805 = vmatmul.f32.gmra.mxu0 %v503
        %v806 = vpop.f32.mrf.mxu0
        %v807 = vadd.f32 %v716, %v806
        %808 = vdwg.mxu0
        %809 = vmatpush.msra.mxu0 0.0
        %810 = vmatpush.msra.mxu0 0.0
        %811 = vmatpush.msra.mxu0 0.0
        %812 = vmatpush.msra.mxu0 0.0
        %813 = vmatpush.msra.mxu0 0.0
        %814 = vmatpush.msra.mxu0 0.0
        %815 = vmatpush.msra.mxu0 0.0
        %816 = vmatpush.msra.mxu0 0.0
        %817 = vmatpush.msra.mxu0 0.0
        %818 = vmatpush.msra.mxu0 0.0
        %819 = vmatpush.msra.mxu0 0.0
        %820 = vmatpush.msra.mxu0 0.0
        %821 = vmatpush.msra.mxu0 %v684
        %822 = vmatpush.msra.mxu0 %v683
        %823 = vmatpush.msra.mxu0 %v682
        %824 = vmatpush.msra.mxu0 %v681
        %825 = vmatmul.f32.gmra.mxu0 %v503
        %v826 = vpop.f32.mrf.mxu0
        %v827 = vadd.f32 %v717, %v826
        %828 = vdwg.mxu0
        %829 = vmatpush.msra.mxu0 0.0
        %830 = vmatpush.msra.mxu0 0.0
        %831 = vmatpush.msra.mxu0 0.0
        %832 = vmatpush.msra.mxu0 0.0
        %833 = vmatpush.msra.mxu0 0.0
        %834 = vmatpush.msra.mxu0 0.0
        %835 = vmatpush.msra.mxu0 0.0
        %836 = vmatpush.msra.mxu0 0.0
        %837 = vmatpush.msra.mxu0 0.0
        %838 = vmatpush.msra.mxu0 0.0
        %839 = vmatpush.msra.mxu0 0.0
        %840 = vmatpush.msra.mxu0 0.0
        %841 = vmatpush.msra.mxu0 %v688
        %842 = vmatpush.msra.mxu0 %v687
        %843 = vmatpush.msra.mxu0 %v686
        %844 = vmatpush.msra.mxu0 %v685
        %845 = vmatmul.f32.gmra.mxu0 %v503
        %v846 = vpop.f32.mrf.mxu0
        %v847 = vadd.f32 %v718, %v846
        %848 = vdwg.mxu0
        %849 = vmatpush.msra.mxu0 0.0
        %850 = vmatpush.msra.mxu0 0.0
        %851 = vmatpush.msra.mxu0 0.0
        %852 = vmatpush.msra.mxu0 0.0
        %853 = vmatpush.msra.mxu0 0.0
        %854 = vmatpush.msra.mxu0 0.0
        %855 = vmatpush.msra.mxu0 0.0
        %856 = vmatpush.msra.mxu0 0.0
        %857 = vmatpush.msra.mxu0 0.0
        %858 = vmatpush.msra.mxu0 0.0
        %859 = vmatpush.msra.mxu0 0.0
        %860 = vmatpush.msra.mxu0 0.0
        %861 = vmatpush.msra.mxu0 %v692
        %862 = vmatpush.msra.mxu0 %v691
        %863 = vmatpush.msra.mxu0 %v690
        %864 = vmatpush.msra.mxu0 %v689
        %865 = vmatmul.f32.gmra.mxu0 %v503
        %v866 = vpop.f32.mrf.mxu0
        %v867 = vadd.f32 %v719, %v866
        %868 = vdwg.mxu0
        %869 = vmatpush.msra.mxu0 0.0
        %870 = vmatpush.msra.mxu0 0.0
        %871 = vmatpush.msra.mxu0 0.0
        %872 = vmatpush.msra.mxu0 0.0
        %873 = vmatpush.msra.mxu0 0.0
        %874 = vmatpush.msra.mxu0 0.0
        %875 = vmatpush.msra.mxu0 0.0
        %876 = vmatpush.msra.mxu0 0.0
        %877 = vmatpush.msra.mxu0 0.0
        %878 = vmatpush.msra.mxu0 0.0
        %879 = vmatpush.msra.mxu0 0.0
        %880 = vmatpush.msra.mxu0 0.0
        %881 = vmatpush.msra.mxu0 %v696
        %882 = vmatpush.msra.mxu0 %v695
        %883 = vmatpush.msra.mxu0 %v694
        %884 = vmatpush.msra.mxu0 %v693
        %885 = vmatmul.f32.gmra.mxu0 %v503
        %v886 = vpop.f32.mrf.mxu0
        %v887 = vadd.f32 %v720, %v886
        %888 = vdwg.mxu0
        %v889 = vld [vmem:[%s3] sm:$0xff]
        %v890 = vld [vmem:[%s3 + $0x8] sm:$0xff]
        %v891 = vld [vmem:[%s3 + $0x10] sm:$0xff]
        %v892 = vld [vmem:[%s3 + $0x18] sm:$0xff]
        %v893 = vld [vmem:[%s3 + $0x20] sm:$0xff]
        %v894 = vld [vmem:[%s3 + $0x28] sm:$0xff]
        %v895 = vld [vmem:[%s3 + $0x30] sm:$0xff]
        %v896 = vld [vmem:[%s3 + $0x38] sm:$0xff]
        %v897 = vld [vmem:[%s3 + $0x40] sm:$0xff]
        %v898 = vld [vmem:[%s3 + $0x48] sm:$0xff]
        %v899 = vld [vmem:[%s3 + $0x50] sm:$0xff]
        %v900 = vld [vmem:[%s3 + $0x58] sm:$0xff]
        %v901 = vld [vmem:[%s3 + $0x60] sm:$0xff]
        %v902 = vld [vmem:[%s3 + $0x68] sm:$0xff]
        %v903 = vld [vmem:[%s3 + $0x70] sm:$0xff]
        %v904 = vld [vmem:[%s3 + $0x78] sm:$0xff]
        %v905 = vld [vmem:[%s3 + $0x80] sm:$0xff]
        %v906 = vld [vmem:[%s3 + $0x88] sm:$0xff]
        %v907 = vld [vmem:[%s3 + $0x90] sm:$0xff]
        %v908 = vld [vmem:[%s3 + $0x98] sm:$0xff]
        %v909 = vld [vmem:[%s3 + $0xa0] sm:$0xff]
        %v910 = vld [vmem:[%s3 + $0xa8] sm:$0xff]
        %v911 = vld [vmem:[%s3 + $0xb0] sm:$0xff]
        %v912 = vld [vmem:[%s3 + $0xb8] sm:$0xff]
        %v913 = vld [vmem:[%s3 + $0xc0] sm:$0xff]
        %v914 = vld [vmem:[%s3 + $0xc8] sm:$0xff]
        %v915 = vld [vmem:[%s3 + $0xd0] sm:$0xff]
        %v916 = vld [vmem:[%s3 + $0xd8] sm:$0xff]
        %v917 = vld [vmem:[%s3 + $0xe0] sm:$0xff]
        %v918 = vld [vmem:[%s3 + $0xe8] sm:$0xff]
        %v919 = vld [vmem:[%s3 + $0xf0] sm:$0xff]
        %v920 = vld [vmem:[%s3 + $0xf8] sm:$0xff]
        %v921 = vld [vmem:[%s6] sm:$0x1]
        %v922 = vld [vmem:[%s6 + $0x1] sm:$0x1]
        %v923 = vld [vmem:[%s6 + $0x2] sm:$0x1]
        %v924 = vld [vmem:[%s6 + $0x3] sm:$0x1]
        %v925 = vld [vmem:[%s6 + $0x4] sm:$0x1]
        %v926 = vld [vmem:[%s6 + $0x5] sm:$0x1]
        %v927 = vld [vmem:[%s6 + $0x6] sm:$0x1]
        %v928 = vld [vmem:[%s6 + $0x7] sm:$0x1]
        %v937 = vperm.slane %v921, 0
        %v938 = vperm.slane %v922, 0
        %v939 = vperm.slane %v923, 0
        %v940 = vperm.slane %v924, 0
        %v941 = vperm.slane %v925, 0
        %v942 = vperm.slane %v926, 0
        %v943 = vperm.slane %v927, 0
        %v944 = vperm.slane %v928, 0
        %953 = vmatpush.msra.mxu0 0.0
        %954 = vmatpush.msra.mxu0 0.0
        %955 = vmatpush.msra.mxu0 0.0
        %956 = vmatpush.msra.mxu0 0.0
        %957 = vmatpush.msra.mxu0 0.0
        %958 = vmatpush.msra.mxu0 0.0
        %959 = vmatpush.msra.mxu0 0.0
        %960 = vmatpush.msra.mxu0 0.0
        %961 = vmatpush.msra.mxu0 0.0
        %962 = vmatpush.msra.mxu0 0.0
        %963 = vmatpush.msra.mxu0 0.0
        %964 = vmatpush.msra.mxu0 0.0
        %965 = vmatpush.msra.mxu0 %v892
        %966 = vmatpush.msra.mxu0 %v891
        %967 = vmatpush.msra.mxu0 %v890
        %968 = vmatpush.msra.mxu0 %v889
        %969 = vmatmul.f32.gmra.mxu0 %v503
        %v970 = vpop.f32.mrf.mxu0
        %v971 = vadd.f32 %v937, %v970
        %972 = vdwg.mxu0
        %973 = vmatpush.msra.mxu0 0.0
        %974 = vmatpush.msra.mxu0 0.0
        %975 = vmatpush.msra.mxu0 0.0
        %976 = vmatpush.msra.mxu0 0.0
        %977 = vmatpush.msra.mxu0 0.0
        %978 = vmatpush.msra.mxu0 0.0
        %979 = vmatpush.msra.mxu0 0.0
        %980 = vmatpush.msra.mxu0 0.0
        %981 = vmatpush.msra.mxu0 0.0
        %982 = vmatpush.msra.mxu0 0.0
        %983 = vmatpush.msra.mxu0 0.0
        %984 = vmatpush.msra.mxu0 0.0
        %985 = vmatpush.msra.mxu0 %v896
        %986 = vmatpush.msra.mxu0 %v895
        %987 = vmatpush.msra.mxu0 %v894
        %988 = vmatpush.msra.mxu0 %v893
        %989 = vmatmul.f32.gmra.mxu0 %v503
        %v990 = vpop.f32.mrf.mxu0
        %v991 = vadd.f32 %v938, %v990
        %992 = vdwg.mxu0
        %993 = vmatpush.msra.mxu0 0.0
        %994 = vmatpush.msra.mxu0 0.0
        %995 = vmatpush.msra.mxu0 0.0
        %996 = vmatpush.msra.mxu0 0.0
        %997 = vmatpush.msra.mxu0 0.0
        %998 = vmatpush.msra.mxu0 0.0
        %999 = vmatpush.msra.mxu0 0.0
        %1000 = vmatpush.msra.mxu0 0.0
        %1001 = vmatpush.msra.mxu0 0.0
        %1002 = vmatpush.msra.mxu0 0.0
        %1003 = vmatpush.msra.mxu0 0.0
        %1004 = vmatpush.msra.mxu0 0.0
        %1005 = vmatpush.msra.mxu0 %v900
        %1006 = vmatpush.msra.mxu0 %v899
        %1007 = vmatpush.msra.mxu0 %v898
        %1008 = vmatpush.msra.mxu0 %v897
        %1009 = vmatmul.f32.gmra.mxu0 %v503
        %v1010 = vpop.f32.mrf.mxu0
        %v1011 = vadd.f32 %v939, %v1010
        %1012 = vdwg.mxu0
        %1013 = vmatpush.msra.mxu0 0.0
        %1014 = vmatpush.msra.mxu0 0.0
        %1015 = vmatpush.msra.mxu0 0.0
        %1016 = vmatpush.msra.mxu0 0.0
        %1017 = vmatpush.msra.mxu0 0.0
        %1018 = vmatpush.msra.mxu0 0.0
        %1019 = vmatpush.msra.mxu0 0.0
        %1020 = vmatpush.msra.mxu0 0.0
        %1021 = vmatpush.msra.mxu0 0.0
        %1022 = vmatpush.msra.mxu0 0.0
        %1023 = vmatpush.msra.mxu0 0.0
        %1024 = vmatpush.msra.mxu0 0.0
        %1025 = vmatpush.msra.mxu0 %v904
        %1026 = vmatpush.msra.mxu0 %v903
        %1027 = vmatpush.msra.mxu0 %v902
        %1028 = vmatpush.msra.mxu0 %v901
        %1029 = vmatmul.f32.gmra.mxu0 %v503
        %v1030 = vpop.f32.mrf.mxu0
        %v1031 = vadd.f32 %v940, %v1030
        %1032 = vdwg.mxu0
        %1033 = vmatpush.msra.mxu0 0.0
        %1034 = vmatpush.msra.mxu0 0.0
        %1035 = vmatpush.msra.mxu0 0.0
        %1036 = vmatpush.msra.mxu0 0.0
        %1037 = vmatpush.msra.mxu0 0.0
        %1038 = vmatpush.msra.mxu0 0.0
        %1039 = vmatpush.msra.mxu0 0.0
        %1040 = vmatpush.msra.mxu0 0.0
        %1041 = vmatpush.msra.mxu0 0.0
        %1042 = vmatpush.msra.mxu0 0.0
        %1043 = vmatpush.msra.mxu0 0.0
        %1044 = vmatpush.msra.mxu0 0.0
        %1045 = vmatpush.msra.mxu0 %v908
        %1046 = vmatpush.msra.mxu0 %v907
        %1047 = vmatpush.msra.mxu0 %v906
        %1048 = vmatpush.msra.mxu0 %v905
        %1049 = vmatmul.f32.gmra.mxu0 %v503
        %v1050 = vpop.f32.mrf.mxu0
        %v1051 = vadd.f32 %v941, %v1050
        %1052 = vdwg.mxu0
        %1053 = vmatpush.msra.mxu0 0.0
        %1054 = vmatpush.msra.mxu0 0.0
        %1055 = vmatpush.msra.mxu0 0.0
        %1056 = vmatpush.msra.mxu0 0.0
        %1057 = vmatpush.msra.mxu0 0.0
        %1058 = vmatpush.msra.mxu0 0.0
        %1059 = vmatpush.msra.mxu0 0.0
        %1060 = vmatpush.msra.mxu0 0.0
        %1061 = vmatpush.msra.mxu0 0.0
        %1062 = vmatpush.msra.mxu0 0.0
        %1063 = vmatpush.msra.mxu0 0.0
        %1064 = vmatpush.msra.mxu0 0.0
        %1065 = vmatpush.msra.mxu0 %v912
        %1066 = vmatpush.msra.mxu0 %v911
        %1067 = vmatpush.msra.mxu0 %v910
        %1068 = vmatpush.msra.mxu0 %v909
        %1069 = vmatmul.f32.gmra.mxu0 %v503
        %v1070 = vpop.f32.mrf.mxu0
        %v1071 = vadd.f32 %v942, %v1070
        %1072 = vdwg.mxu0
        %1073 = vmatpush.msra.mxu0 0.0
        %1074 = vmatpush.msra.mxu0 0.0
        %1075 = vmatpush.msra.mxu0 0.0
        %1076 = vmatpush.msra.mxu0 0.0
        %1077 = vmatpush.msra.mxu0 0.0
        %1078 = vmatpush.msra.mxu0 0.0
        %1079 = vmatpush.msra.mxu0 0.0
        %1080 = vmatpush.msra.mxu0 0.0
        %1081 = vmatpush.msra.mxu0 0.0
        %1082 = vmatpush.msra.mxu0 0.0
        %1083 = vmatpush.msra.mxu0 0.0
        %1084 = vmatpush.msra.mxu0 0.0
        %1085 = vmatpush.msra.mxu0 %v916
        %1086 = vmatpush.msra.mxu0 %v915
        %1087 = vmatpush.msra.mxu0 %v914
        %1088 = vmatpush.msra.mxu0 %v913
        %1089 = vmatmul.f32.gmra.mxu0 %v503
        %v1090 = vpop.f32.mrf.mxu0
        %v1091 = vadd.f32 %v943, %v1090
        %1092 = vdwg.mxu0
        %1093 = vmatpush.msra.mxu0 0.0
        %1094 = vmatpush.msra.mxu0 0.0
        %1095 = vmatpush.msra.mxu0 0.0
        %1096 = vmatpush.msra.mxu0 0.0
        %1097 = vmatpush.msra.mxu0 0.0
        %1098 = vmatpush.msra.mxu0 0.0
        %1099 = vmatpush.msra.mxu0 0.0
        %1100 = vmatpush.msra.mxu0 0.0
        %1101 = vmatpush.msra.mxu0 0.0
        %1102 = vmatpush.msra.mxu0 0.0
        %1103 = vmatpush.msra.mxu0 0.0
        %1104 = vmatpush.msra.mxu0 0.0
        %1105 = vmatpush.msra.mxu0 %v920
        %1106 = vmatpush.msra.mxu0 %v919
        %1107 = vmatpush.msra.mxu0 %v918
        %1108 = vmatpush.msra.mxu0 %v917
        %1109 = vmatmul.f32.gmra.mxu0 %v503
        %v1110 = vpop.f32.mrf.mxu0
        %v1111 = vadd.f32 %v944, %v1110
        %1112 = vdwg.mxu0
        %v1114 = vsel %vm501, %v747, 0
        %v1117 = vsel %vm501, %v523, 0
        %1119 = vmatpush.xpose.msra.mxu0 0.0
        %1120 = vmatpush.xpose.msra.mxu0 0.0
        %1121 = vmatpush.xpose.msra.mxu0 0.0
        %1122 = vmatpush.xpose.msra.mxu0 0.0
        %1123 = vmatpush.xpose.msra.mxu0 0.0
        %1124 = vmatpush.xpose.msra.mxu0 0.0
        %1125 = vmatpush.xpose.msra.mxu0 0.0
        %1126 = vmatpush.xpose.msra.mxu0 0.0
        %1127 = vmatpush.xpose.msra.mxu0 0.0
        %1128 = vmatpush.xpose.msra.mxu0 0.0
        %1129 = vmatpush.xpose.msra.mxu0 0.0
        %1130 = vmatpush.xpose.msra.mxu0 0.0
        %1131 = vmatpush.xpose.msra.mxu0 0.0
        %1132 = vmatpush.xpose.msra.mxu0 0.0
        %1133 = vmatpush.xpose.msra.mxu0 0.0
        %1134 = vmatpush.xpose.msra.mxu0 %v1117
        %1135 = vmatmul.f32.gmra.mxu0 %v1114
        %v1136 = vpop.f32.mrf.mxu0
        %v1137 = vadd.f32 0.0, %v1136
        %1138 = vdwg.mxu0
        %v1140 = vsel %vm501, %v767, 0
        %v1143 = vsel %vm501, %v543, 0
        %1145 = vmatpush.xpose.msra.mxu0 0.0
        %1146 = vmatpush.xpose.msra.mxu0 0.0
        %1147 = vmatpush.xpose.msra.mxu0 0.0
        %1148 = vmatpush.xpose.msra.mxu0 0.0
        %1149 = vmatpush.xpose.msra.mxu0 0.0
        %1150 = vmatpush.xpose.msra.mxu0 0.0
        %1151 = vmatpush.xpose.msra.mxu0 0.0
        %1152 = vmatpush.xpose.msra.mxu0 0.0
        %1153 = vmatpush.xpose.msra.mxu0 0.0
        %1154 = vmatpush.xpose.msra.mxu0 0.0
        %1155 = vmatpush.xpose.msra.mxu0 0.0
        %1156 = vmatpush.xpose.msra.mxu0 0.0
        %1157 = vmatpush.xpose.msra.mxu0 0.0
        %1158 = vmatpush.xpose.msra.mxu0 0.0
        %1159 = vmatpush.xpose.msra.mxu0 0.0
        %1160 = vmatpush.xpose.msra.mxu0 %v1143
        %1161 = vmatmul.f32.gmra.mxu0 %v1140
        %v1162 = vpop.f32.mrf.mxu0
        %v1163 = vadd.f32 0.0, %v1162
        %1164 = vdwg.mxu0
        %v1166 = vsel %vm501, %v787, 0
        %v1169 = vsel %vm501, %v563, 0
        %1171 = vmatpush.xpose.msra.mxu0 0.0
        %1172 = vmatpush.xpose.msra.mxu0 0.0
        %1173 = vmatpush.xpose.msra.mxu0 0.0
        %1174 = vmatpush.xpose.msra.mxu0 0.0
        %1175 = vmatpush.xpose.msra.mxu0 0.0
        %1176 = vmatpush.xpose.msra.mxu0 0.0
        %1177 = vmatpush.xpose.msra.mxu0 0.0
        %1178 = vmatpush.xpose.msra.mxu0 0.0
        %1179 = vmatpush.xpose.msra.mxu0 0.0
        %1180 = vmatpush.xpose.msra.mxu0 0.0
        %1181 = vmatpush.xpose.msra.mxu0 0.0
        %1182 = vmatpush.xpose.msra.mxu0 0.0
        %1183 = vmatpush.xpose.msra.mxu0 0.0
        %1184 = vmatpush.xpose.msra.mxu0 0.0
        %1185 = vmatpush.xpose.msra.mxu0 0.0
        %1186 = vmatpush.xpose.msra.mxu0 %v1169
        %1187 = vmatmul.f32.gmra.mxu0 %v1166
        %v1188 = vpop.f32.mrf.mxu0
        %v1189 = vadd.f32 0.0, %v1188
        %1190 = vdwg.mxu0
        %v1192 = vsel %vm501, %v807, 0
        %v1195 = vsel %vm501, %v583, 0
        %1197 = vmatpush.xpose.msra.mxu0 0.0
        %1198 = vmatpush.xpose.msra.mxu0 0.0
        %1199 = vmatpush.xpose.msra.mxu0 0.0
        %1200 = vmatpush.xpose.msra.mxu0 0.0
        %1201 = vmatpush.xpose.msra.mxu0 0.0
        %1202 = vmatpush.xpose.msra.mxu0 0.0
        %1203 = vmatpush.xpose.msra.mxu0 0.0
        %1204 = vmatpush.xpose.msra.mxu0 0.0
        %1205 = vmatpush.xpose.msra.mxu0 0.0
        %1206 = vmatpush.xpose.msra.mxu0 0.0
        %1207 = vmatpush.xpose.msra.mxu0 0.0
        %1208 = vmatpush.xpose.msra.mxu0 0.0
        %1209 = vmatpush.xpose.msra.mxu0 0.0
        %1210 = vmatpush.xpose.msra.mxu0 0.0
        %1211 = vmatpush.xpose.msra.mxu0 0.0
        %1212 = vmatpush.xpose.msra.mxu0 %v1195
        %1213 = vmatmul.f32.gmra.mxu0 %v1192
        %v1214 = vpop.f32.mrf.mxu0
        %v1215 = vadd.f32 0.0, %v1214
        %1216 = vdwg.mxu0
        %v1218 = vsel %vm501, %v827, 0
        %v1221 = vsel %vm501, %v603, 0
        %1223 = vmatpush.xpose.msra.mxu0 0.0
        %1224 = vmatpush.xpose.msra.mxu0 0.0
        %1225 = vmatpush.xpose.msra.mxu0 0.0
        %1226 = vmatpush.xpose.msra.mxu0 0.0
        %1227 = vmatpush.xpose.msra.mxu0 0.0
        %1228 = vmatpush.xpose.msra.mxu0 0.0
        %1229 = vmatpush.xpose.msra.mxu0 0.0
        %1230 = vmatpush.xpose.msra.mxu0 0.0
        %1231 = vmatpush.xpose.msra.mxu0 0.0
        %1232 = vmatpush.xpose.msra.mxu0 0.0
        %1233 = vmatpush.xpose.msra.mxu0 0.0
        %1234 = vmatpush.xpose.msra.mxu0 0.0
        %1235 = vmatpush.xpose.msra.mxu0 0.0
        %1236 = vmatpush.xpose.msra.mxu0 0.0
        %1237 = vmatpush.xpose.msra.mxu0 0.0
        %1238 = vmatpush.xpose.msra.mxu0 %v1221
        %1239 = vmatmul.f32.gmra.mxu0 %v1218
        %v1240 = vpop.f32.mrf.mxu0
        %v1241 = vadd.f32 0.0, %v1240
        %1242 = vdwg.mxu0
        %v1244 = vsel %vm501, %v847, 0
        %v1247 = vsel %vm501, %v623, 0
        %1249 = vmatpush.xpose.msra.mxu0 0.0
        %1250 = vmatpush.xpose.msra.mxu0 0.0
        %1251 = vmatpush.xpose.msra.mxu0 0.0
        %1252 = vmatpush.xpose.msra.mxu0 0.0
        %1253 = vmatpush.xpose.msra.mxu0 0.0
        %1254 = vmatpush.xpose.msra.mxu0 0.0
        %1255 = vmatpush.xpose.msra.mxu0 0.0
        %1256 = vmatpush.xpose.msra.mxu0 0.0
        %1257 = vmatpush.xpose.msra.mxu0 0.0
        %1258 = vmatpush.xpose.msra.mxu0 0.0
        %1259 = vmatpush.xpose.msra.mxu0 0.0
        %1260 = vmatpush.xpose.msra.mxu0 0.0
        %1261 = vmatpush.xpose.msra.mxu0 0.0
        %1262 = vmatpush.xpose.msra.mxu0 0.0
        %1263 = vmatpush.xpose.msra.mxu0 0.0
        %1264 = vmatpush.xpose.msra.mxu0 %v1247
        %1265 = vmatmul.f32.gmra.mxu0 %v1244
        %v1266 = vpop.f32.mrf.mxu0
        %v1267 = vadd.f32 0.0, %v1266
        %1268 = vdwg.mxu0
        %v1270 = vsel %vm501, %v867, 0
        %v1273 = vsel %vm501, %v643, 0
        %1275 = vmatpush.xpose.msra.mxu0 0.0
        %1276 = vmatpush.xpose.msra.mxu0 0.0
        %1277 = vmatpush.xpose.msra.mxu0 0.0
        %1278 = vmatpush.xpose.msra.mxu0 0.0
        %1279 = vmatpush.xpose.msra.mxu0 0.0
        %1280 = vmatpush.xpose.msra.mxu0 0.0
        %1281 = vmatpush.xpose.msra.mxu0 0.0
        %1282 = vmatpush.xpose.msra.mxu0 0.0
        %1283 = vmatpush.xpose.msra.mxu0 0.0
        %1284 = vmatpush.xpose.msra.mxu0 0.0
        %1285 = vmatpush.xpose.msra.mxu0 0.0
        %1286 = vmatpush.xpose.msra.mxu0 0.0
        %1287 = vmatpush.xpose.msra.mxu0 0.0
        %1288 = vmatpush.xpose.msra.mxu0 0.0
        %1289 = vmatpush.xpose.msra.mxu0 0.0
        %1290 = vmatpush.xpose.msra.mxu0 %v1273
        %1291 = vmatmul.f32.gmra.mxu0 %v1270
        %v1292 = vpop.f32.mrf.mxu0
        %v1293 = vadd.f32 0.0, %v1292
        %1294 = vdwg.mxu0
        %v1296 = vsel %vm501, %v887, 0
        %v1299 = vsel %vm501, %v663, 0
        %1301 = vmatpush.xpose.msra.mxu0 0.0
        %1302 = vmatpush.xpose.msra.mxu0 0.0
        %1303 = vmatpush.xpose.msra.mxu0 0.0
        %1304 = vmatpush.xpose.msra.mxu0 0.0
        %1305 = vmatpush.xpose.msra.mxu0 0.0
        %1306 = vmatpush.xpose.msra.mxu0 0.0
        %1307 = vmatpush.xpose.msra.mxu0 0.0
        %1308 = vmatpush.xpose.msra.mxu0 0.0
        %1309 = vmatpush.xpose.msra.mxu0 0.0
        %1310 = vmatpush.xpose.msra.mxu0 0.0
        %1311 = vmatpush.xpose.msra.mxu0 0.0
        %1312 = vmatpush.xpose.msra.mxu0 0.0
        %1313 = vmatpush.xpose.msra.mxu0 0.0
        %1314 = vmatpush.xpose.msra.mxu0 0.0
        %1315 = vmatpush.xpose.msra.mxu0 0.0
        %1316 = vmatpush.xpose.msra.mxu0 %v1299
        %1317 = vmatmul.f32.gmra.mxu0 %v1296
        %v1318 = vpop.f32.mrf.mxu0
        %v1319 = vadd.f32 0.0, %v1318
        %1320 = vdwg.mxu0
        %vm1321 = vcmask 64512
        %v1322 = vsel %vm1321, %v1137, -inf
        %1323 = vmax.xlane.f32.xlu0 %v1322
        %v1324 = vpop.xlane.xlu0 %1323
        %v1325 = vsel %vm1321, %v1163, -inf
        %1326 = vmax.xlane.f32.xlu0 %v1325
        %v1327 = vpop.xlane.xlu0 %1326
        %v1328 = vsel %vm1321, %v1189, -inf
        %1329 = vmax.xlane.f32.xlu0 %v1328
        %v1330 = vpop.xlane.xlu0 %1329
        %v1331 = vsel %vm1321, %v1215, -inf
        %1332 = vmax.xlane.f32.xlu0 %v1331
        %v1333 = vpop.xlane.xlu0 %1332
        %v1334 = vsel %vm1321, %v1241, -inf
        %1335 = vmax.xlane.f32.xlu0 %v1334
        %v1336 = vpop.xlane.xlu0 %1335
        %v1337 = vsel %vm1321, %v1267, -inf
        %1338 = vmax.xlane.f32.xlu0 %v1337
        %v1339 = vpop.xlane.xlu0 %1338
        %v1340 = vsel %vm1321, %v1293, -inf
        %1341 = vmax.xlane.f32.xlu0 %v1340
        %v1342 = vpop.xlane.xlu0 %1341
        %v1343 = vsel %vm1321, %v1319, -inf
        %1344 = vmax.xlane.f32.xlu0 %v1343
        %v1345 = vpop.xlane.xlu0 %1344
        %v1346 = vsub.f32 %v1137, %v1324
        %v1347 = vsub.f32 %v1163, %v1327
        %v1348 = vsub.f32 %v1189, %v1330
        %v1349 = vsub.f32 %v1215, %v1333
        %v1350 = vsub.f32 %v1241, %v1336
        %v1351 = vsub.f32 %v1267, %v1339
        %v1352 = vsub.f32 %v1293, %v1342
        %v1353 = vsub.f32 %v1319, %v1345
        %v1354 = vmul.f32 %v1346, 1.442695
        %v1355 = vpow.pop %v1354
        %v1356 = vmul.f32 %v1347, 1.442695
        %v1357 = vpow.pop %v1356
        %v1358 = vmul.f32 %v1348, 1.442695
        %v1359 = vpow.pop %v1358
        %v1360 = vmul.f32 %v1349, 1.442695
        %v1361 = vpow.pop %v1360
        %v1362 = vmul.f32 %v1350, 1.442695
        %v1363 = vpow.pop %v1362
        %v1364 = vmul.f32 %v1351, 1.442695
        %v1365 = vpow.pop %v1364
        %v1366 = vmul.f32 %v1352, 1.442695
        %v1367 = vpow.pop %v1366
        %v1368 = vmul.f32 %v1353, 1.442695
        %v1369 = vpow.pop %v1368
        %v1370 = vsel %vm1321, %v1355, 0.0
        %1371 = vadd.xlane.f32.xlu0 %v1370
        %v1372 = vpop.xlane.xlu0 %1371
        %v1373 = vsel %vm1321, %v1357, 0.0
        %1374 = vadd.xlane.f32.xlu0 %v1373
        %v1375 = vpop.xlane.xlu0 %1374
        %v1376 = vsel %vm1321, %v1359, 0.0
        %1377 = vadd.xlane.f32.xlu0 %v1376
        %v1378 = vpop.xlane.xlu0 %1377
        %v1379 = vsel %vm1321, %v1361, 0.0
        %1380 = vadd.xlane.f32.xlu0 %v1379
        %v1381 = vpop.xlane.xlu0 %1380
        %v1382 = vsel %vm1321, %v1363, 0.0
        %1383 = vadd.xlane.f32.xlu0 %v1382
        %v1384 = vpop.xlane.xlu0 %1383
        %v1385 = vsel %vm1321, %v1365, 0.0
        %1386 = vadd.xlane.f32.xlu0 %v1385
        %v1387 = vpop.xlane.xlu0 %1386
        %v1388 = vsel %vm1321, %v1367, 0.0
        %1389 = vadd.xlane.f32.xlu0 %v1388
        %v1390 = vpop.xlane.xlu0 %1389
        %v1391 = vsel %vm1321, %v1369, 0.0
        %1392 = vadd.xlane.f32.xlu0 %v1391
        %v1393 = vpop.xlane.xlu0 %1392
        %v1394 = vrcp.pop %v1372
        %v1395 = vrcp.pop %v1375
        %v1396 = vrcp.pop %v1378
        %v1397 = vrcp.pop %v1381
        %v1398 = vrcp.pop %v1384
        %v1399 = vrcp.pop %v1387
        %v1400 = vrcp.pop %v1390
        %v1401 = vrcp.pop %v1393
        %v1402 = vmul.f32 %v1355, %v1394
        %v1403 = vmul.f32 %v1357, %v1395
        %v1404 = vmul.f32 %v1359, %v1396
        %v1405 = vmul.f32 %v1361, %v1397
        %v1406 = vmul.f32 %v1363, %v1398
        %v1407 = vmul.f32 %v1365, %v1399
        %v1408 = vmul.f32 %v1367, %v1400
        %v1409 = vmul.f32 %v1369, %v1401
        %v1411 = vsel %vm1321, %v1402, 0
        %1413 = vmatpush.msra.mxu0 0.0
        %1414 = vmatpush.msra.mxu0 0.0
        %1415 = vmatpush.msra.mxu0 0.0
        %1416 = vmatpush.msra.mxu0 0.0
        %1417 = vmatpush.msra.mxu0 0.0
        %1418 = vmatpush.msra.mxu0 0.0
        %1419 = vmatpush.msra.mxu0 0.0
        %1420 = vmatpush.msra.mxu0 0.0
        %1421 = vmatpush.msra.mxu0 0.0
        %1422 = vmatpush.msra.mxu0 0.0
        %1423 = vmatpush.msra.mxu0 0.0
        %1424 = vmatpush.msra.mxu0 0.0
        %1425 = vmatpush.msra.mxu0 0.0
        %1426 = vmatpush.msra.mxu0 0.0
        %1427 = vmatpush.msra.mxu0 0.0
        %1428 = vmatpush.msra.mxu0 %v971
        %1429 = vmatmul.f32.gmra.mxu0 %v1411
        %v1430 = vpop.f32.mrf.mxu0
        %v1431 = vadd.f32 0.0, %v1430
        %1432 = vdwg.mxu0
        %v1434 = vsel %vm1321, %v1403, 0
        %1436 = vmatpush.msra.mxu0 0.0
        %1437 = vmatpush.msra.mxu0 0.0
        %1438 = vmatpush.msra.mxu0 0.0
        %1439 = vmatpush.msra.mxu0 0.0
        %1440 = vmatpush.msra.mxu0 0.0
        %1441 = vmatpush.msra.mxu0 0.0
        %1442 = vmatpush.msra.mxu0 0.0
        %1443 = vmatpush.msra.mxu0 0.0
        %1444 = vmatpush.msra.mxu0 0.0
        %1445 = vmatpush.msra.mxu0 0.0
        %1446 = vmatpush.msra.mxu0 0.0
        %1447 = vmatpush.msra.mxu0 0.0
        %1448 = vmatpush.msra.mxu0 0.0
        %1449 = vmatpush.msra.mxu0 0.0
        %1450 = vmatpush.msra.mxu0 0.0
        %1451 = vmatpush.msra.mxu0 %v991
        %1452 = vmatmul.f32.gmra.mxu0 %v1434
        %v1453 = vpop.f32.mrf.mxu0
        %v1454 = vadd.f32 0.0, %v1453
        %1455 = vdwg.mxu0
        %v1457 = vsel %vm1321, %v1404, 0
        %1459 = vmatpush.msra.mxu0 0.0
        %1460 = vmatpush.msra.mxu0 0.0
        %1461 = vmatpush.msra.mxu0 0.0
        %1462 = vmatpush.msra.mxu0 0.0
        %1463 = vmatpush.msra.mxu0 0.0
        %1464 = vmatpush.msra.mxu0 0.0
        %1465 = vmatpush.msra.mxu0 0.0
        %1466 = vmatpush.msra.mxu0 0.0
        %1467 = vmatpush.msra.mxu0 0.0
        %1468 = vmatpush.msra.mxu0 0.0
        %1469 = vmatpush.msra.mxu0 0.0
        %1470 = vmatpush.msra.mxu0 0.0
        %1471 = vmatpush.msra.mxu0 0.0
        %1472 = vmatpush.msra.mxu0 0.0
        %1473 = vmatpush.msra.mxu0 0.0
        %1474 = vmatpush.msra.mxu0 %v1011
        %1475 = vmatmul.f32.gmra.mxu0 %v1457
        %v1476 = vpop.f32.mrf.mxu0
        %v1477 = vadd.f32 0.0, %v1476
        %1478 = vdwg.mxu0
        %v1480 = vsel %vm1321, %v1405, 0
        %1482 = vmatpush.msra.mxu0 0.0
        %1483 = vmatpush.msra.mxu0 0.0
        %1484 = vmatpush.msra.mxu0 0.0
        %1485 = vmatpush.msra.mxu0 0.0
        %1486 = vmatpush.msra.mxu0 0.0
        %1487 = vmatpush.msra.mxu0 0.0
        %1488 = vmatpush.msra.mxu0 0.0
        %1489 = vmatpush.msra.mxu0 0.0
        %1490 = vmatpush.msra.mxu0 0.0
        %1491 = vmatpush.msra.mxu0 0.0
        %1492 = vmatpush.msra.mxu0 0.0
        %1493 = vmatpush.msra.mxu0 0.0
        %1494 = vmatpush.msra.mxu0 0.0
        %1495 = vmatpush.msra.mxu0 0.0
        %1496 = vmatpush.msra.mxu0 0.0
        %1497 = vmatpush.msra.mxu0 %v1031
        %1498 = vmatmul.f32.gmra.mxu0 %v1480
        %v1499 = vpop.f32.mrf.mxu0
        %v1500 = vadd.f32 0.0, %v1499
        %1501 = vdwg.mxu0
        %v1503 = vsel %vm1321, %v1406, 0
        %1505 = vmatpush.msra.mxu0 0.0
        %1506 = vmatpush.msra.mxu0 0.0
        %1507 = vmatpush.msra.mxu0 0.0
        %1508 = vmatpush.msra.mxu0 0.0
        %1509 = vmatpush.msra.mxu0 0.0
        %1510 = vmatpush.msra.mxu0 0.0
        %1511 = vmatpush.msra.mxu0 0.0
        %1512 = vmatpush.msra.mxu0 0.0
        %1513 = vmatpush.msra.mxu0 0.0
        %1514 = vmatpush.msra.mxu0 0.0
        %1515 = vmatpush.msra.mxu0 0.0
        %1516 = vmatpush.msra.mxu0 0.0
        %1517 = vmatpush.msra.mxu0 0.0
        %1518 = vmatpush.msra.mxu0 0.0
        %1519 = vmatpush.msra.mxu0 0.0
        %1520 = vmatpush.msra.mxu0 %v1051
        %1521 = vmatmul.f32.gmra.mxu0 %v1503
        %v1522 = vpop.f32.mrf.mxu0
        %v1523 = vadd.f32 0.0, %v1522
        %1524 = vdwg.mxu0
        %v1526 = vsel %vm1321, %v1407, 0
        %1528 = vmatpush.msra.mxu0 0.0
        %1529 = vmatpush.msra.mxu0 0.0
        %1530 = vmatpush.msra.mxu0 0.0
        %1531 = vmatpush.msra.mxu0 0.0
        %1532 = vmatpush.msra.mxu0 0.0
        %1533 = vmatpush.msra.mxu0 0.0
        %1534 = vmatpush.msra.mxu0 0.0
        %1535 = vmatpush.msra.mxu0 0.0
        %1536 = vmatpush.msra.mxu0 0.0
        %1537 = vmatpush.msra.mxu0 0.0
        %1538 = vmatpush.msra.mxu0 0.0
        %1539 = vmatpush.msra.mxu0 0.0
        %1540 = vmatpush.msra.mxu0 0.0
        %1541 = vmatpush.msra.mxu0 0.0
        %1542 = vmatpush.msra.mxu0 0.0
        %1543 = vmatpush.msra.mxu0 %v1071
        %1544 = vmatmul.f32.gmra.mxu0 %v1526
        %v1545 = vpop.f32.mrf.mxu0
        %v1546 = vadd.f32 0.0, %v1545
        %1547 = vdwg.mxu0
        %v1549 = vsel %vm1321, %v1408, 0
        %1551 = vmatpush.msra.mxu0 0.0
        %1552 = vmatpush.msra.mxu0 0.0
        %1553 = vmatpush.msra.mxu0 0.0
        %1554 = vmatpush.msra.mxu0 0.0
        %1555 = vmatpush.msra.mxu0 0.0
        %1556 = vmatpush.msra.mxu0 0.0
        %1557 = vmatpush.msra.mxu0 0.0
        %1558 = vmatpush.msra.mxu0 0.0
        %1559 = vmatpush.msra.mxu0 0.0
        %1560 = vmatpush.msra.mxu0 0.0
        %1561 = vmatpush.msra.mxu0 0.0
        %1562 = vmatpush.msra.mxu0 0.0
        %1563 = vmatpush.msra.mxu0 0.0
        %1564 = vmatpush.msra.mxu0 0.0
        %1565 = vmatpush.msra.mxu0 0.0
        %1566 = vmatpush.msra.mxu0 %v1091
        %1567 = vmatmul.f32.gmra.mxu0 %v1549
        %v1568 = vpop.f32.mrf.mxu0
        %v1569 = vadd.f32 0.0, %v1568
        %1570 = vdwg.mxu0
        %v1572 = vsel %vm1321, %v1409, 0
        %1574 = vmatpush.msra.mxu0 0.0
        %1575 = vmatpush.msra.mxu0 0.0
        %1576 = vmatpush.msra.mxu0 0.0
        %1577 = vmatpush.msra.mxu0 0.0
        %1578 = vmatpush.msra.mxu0 0.0
        %1579 = vmatpush.msra.mxu0 0.0
        %1580 = vmatpush.msra.mxu0 0.0
        %1581 = vmatpush.msra.mxu0 0.0
        %1582 = vmatpush.msra.mxu0 0.0
        %1583 = vmatpush.msra.mxu0 0.0
        %1584 = vmatpush.msra.mxu0 0.0
        %1585 = vmatpush.msra.mxu0 0.0
        %1586 = vmatpush.msra.mxu0 0.0
        %1587 = vmatpush.msra.mxu0 0.0
        %1588 = vmatpush.msra.mxu0 0.0
        %1589 = vmatpush.msra.mxu0 %v1111
        %1590 = vmatmul.f32.gmra.mxu0 %v1572
        %v1591 = vpop.f32.mrf.mxu0
        %v1592 = vadd.f32 0.0, %v1591
        %1593 = vdwg.mxu0
        %v1594 = vld [vmem:[%s7] sm:$0xff]
        %v1595 = vld [vmem:[%s7 + $0x8] sm:$0xff]
        %v1596 = vld [vmem:[%s7 + $0x10] sm:$0xff]
        %v1597 = vld [vmem:[%s7 + $0x18] sm:$0xff]
        %v1598 = vld [vmem:[%s7 + $0x20] sm:$0xff]
        %v1599 = vld [vmem:[%s7 + $0x28] sm:$0xff]
        %v1600 = vld [vmem:[%s7 + $0x30] sm:$0xff]
        %v1601 = vld [vmem:[%s7 + $0x38] sm:$0xff]
        %v1602 = vld [vmem:[%s7 + $0x40] sm:$0xff]
        %v1603 = vld [vmem:[%s7 + $0x48] sm:$0xff]
        %v1604 = vld [vmem:[%s7 + $0x50] sm:$0xff]
        %v1605 = vld [vmem:[%s7 + $0x58] sm:$0xff]
        %v1606 = vld [vmem:[%s7 + $0x60] sm:$0xff]
        %v1607 = vld [vmem:[%s7 + $0x68] sm:$0xff]
        %v1608 = vld [vmem:[%s7 + $0x70] sm:$0xff]
        %v1609 = vld [vmem:[%s7 + $0x78] sm:$0xff]
        %v1610 = vld [vmem:[%s7 + $0x80] sm:$0xff]
        %v1611 = vld [vmem:[%s7 + $0x88] sm:$0xff]
        %v1612 = vld [vmem:[%s7 + $0x90] sm:$0xff]
        %v1613 = vld [vmem:[%s7 + $0x98] sm:$0xff]
        %v1614 = vld [vmem:[%s7 + $0xa0] sm:$0xff]
        %v1615 = vld [vmem:[%s7 + $0xa8] sm:$0xff]
        %v1616 = vld [vmem:[%s7 + $0xb0] sm:$0xff]
        %v1617 = vld [vmem:[%s7 + $0xb8] sm:$0xff]
        %v1618 = vld [vmem:[%s7 + $0xc0] sm:$0xff]
        %v1619 = vld [vmem:[%s7 + $0xc8] sm:$0xff]
        %v1620 = vld [vmem:[%s7 + $0xd0] sm:$0xff]
        %v1621 = vld [vmem:[%s7 + $0xd8] sm:$0xff]
        %v1622 = vld [vmem:[%s7 + $0xe0] sm:$0xff]
        %v1623 = vld [vmem:[%s7 + $0xe8] sm:$0xff]
        %v1624 = vld [vmem:[%s7 + $0xf0] sm:$0xff]
        %v1625 = vld [vmem:[%s7 + $0xf8] sm:$0xff]
        %v1627 = vsel %vm501, %v1431, 0
        %1629 = vmatpush.msra.mxu0 0.0
        %1630 = vmatpush.msra.mxu0 0.0
        %1631 = vmatpush.msra.mxu0 0.0
        %1632 = vmatpush.msra.mxu0 0.0
        %1633 = vmatpush.msra.mxu0 0.0
        %1634 = vmatpush.msra.mxu0 0.0
        %1635 = vmatpush.msra.mxu0 0.0
        %1636 = vmatpush.msra.mxu0 0.0
        %1637 = vmatpush.msra.mxu0 0.0
        %1638 = vmatpush.msra.mxu0 0.0
        %1639 = vmatpush.msra.mxu0 0.0
        %1640 = vmatpush.msra.mxu0 0.0
        %1641 = vmatpush.msra.mxu0 %v1597
        %1642 = vmatpush.msra.mxu0 %v1596
        %1643 = vmatpush.msra.mxu0 %v1595
        %1644 = vmatpush.msra.mxu0 %v1594
        %1645 = vmatmul.f32.gmra.mxu0 %v1627
        %v1646 = vpop.f32.mrf.mxu0
        %v1647 = vadd.f32 0.0, %v1646
        %1648 = vdwg.mxu0
        %v1650 = vsel %vm501, %v1454, 0
        %1652 = vmatpush.msra.mxu0 0.0
        %1653 = vmatpush.msra.mxu0 0.0
        %1654 = vmatpush.msra.mxu0 0.0
        %1655 = vmatpush.msra.mxu0 0.0
        %1656 = vmatpush.msra.mxu0 0.0
        %1657 = vmatpush.msra.mxu0 0.0
        %1658 = vmatpush.msra.mxu0 0.0
        %1659 = vmatpush.msra.mxu0 0.0
        %1660 = vmatpush.msra.mxu0 0.0
        %1661 = vmatpush.msra.mxu0 0.0
        %1662 = vmatpush.msra.mxu0 0.0
        %1663 = vmatpush.msra.mxu0 0.0
        %1664 = vmatpush.msra.mxu0 %v1601
        %1665 = vmatpush.msra.mxu0 %v1600
        %1666 = vmatpush.msra.mxu0 %v1599
        %1667 = vmatpush.msra.mxu0 %v1598
        %1668 = vmatmul.f32.gmra.mxu0 %v1650
        %v1669 = vpop.f32.mrf.mxu0
        %v1670 = vadd.f32 0.0, %v1669
        %1671 = vdwg.mxu0
        %v1673 = vsel %vm501, %v1477, 0
        %1675 = vmatpush.msra.mxu0 0.0
        %1676 = vmatpush.msra.mxu0 0.0
        %1677 = vmatpush.msra.mxu0 0.0
        %1678 = vmatpush.msra.mxu0 0.0
        %1679 = vmatpush.msra.mxu0 0.0
        %1680 = vmatpush.msra.mxu0 0.0
        %1681 = vmatpush.msra.mxu0 0.0
        %1682 = vmatpush.msra.mxu0 0.0
        %1683 = vmatpush.msra.mxu0 0.0
        %1684 = vmatpush.msra.mxu0 0.0
        %1685 = vmatpush.msra.mxu0 0.0
        %1686 = vmatpush.msra.mxu0 0.0
        %1687 = vmatpush.msra.mxu0 %v1605
        %1688 = vmatpush.msra.mxu0 %v1604
        %1689 = vmatpush.msra.mxu0 %v1603
        %1690 = vmatpush.msra.mxu0 %v1602
        %1691 = vmatmul.f32.gmra.mxu0 %v1673
        %v1692 = vpop.f32.mrf.mxu0
        %v1693 = vadd.f32 0.0, %v1692
        %1694 = vdwg.mxu0
        %v1696 = vsel %vm501, %v1500, 0
        %1698 = vmatpush.msra.mxu0 0.0
        %1699 = vmatpush.msra.mxu0 0.0
        %1700 = vmatpush.msra.mxu0 0.0
        %1701 = vmatpush.msra.mxu0 0.0
        %1702 = vmatpush.msra.mxu0 0.0
        %1703 = vmatpush.msra.mxu0 0.0
        %1704 = vmatpush.msra.mxu0 0.0
        %1705 = vmatpush.msra.mxu0 0.0
        %1706 = vmatpush.msra.mxu0 0.0
        %1707 = vmatpush.msra.mxu0 0.0
        %1708 = vmatpush.msra.mxu0 0.0
        %1709 = vmatpush.msra.mxu0 0.0
        %1710 = vmatpush.msra.mxu0 %v1609
        %1711 = vmatpush.msra.mxu0 %v1608
        %1712 = vmatpush.msra.mxu0 %v1607
        %1713 = vmatpush.msra.mxu0 %v1606
        %1714 = vmatmul.f32.gmra.mxu0 %v1696
        %v1715 = vpop.f32.mrf.mxu0
        %v1716 = vadd.f32 0.0, %v1715
        %1717 = vdwg.mxu0
        %v1719 = vsel %vm501, %v1523, 0
        %1721 = vmatpush.msra.mxu0 0.0
        %1722 = vmatpush.msra.mxu0 0.0
        %1723 = vmatpush.msra.mxu0 0.0
        %1724 = vmatpush.msra.mxu0 0.0
        %1725 = vmatpush.msra.mxu0 0.0
        %1726 = vmatpush.msra.mxu0 0.0
        %1727 = vmatpush.msra.mxu0 0.0
        %1728 = vmatpush.msra.mxu0 0.0
        %1729 = vmatpush.msra.mxu0 0.0
        %1730 = vmatpush.msra.mxu0 0.0
        %1731 = vmatpush.msra.mxu0 0.0
        %1732 = vmatpush.msra.mxu0 0.0
        %1733 = vmatpush.msra.mxu0 %v1613
        %1734 = vmatpush.msra.mxu0 %v1612
        %1735 = vmatpush.msra.mxu0 %v1611
        %1736 = vmatpush.msra.mxu0 %v1610
        %1737 = vmatmul.f32.gmra.mxu0 %v1719
        %v1738 = vpop.f32.mrf.mxu0
        %v1739 = vadd.f32 0.0, %v1738
        %1740 = vdwg.mxu0
        %v1742 = vsel %vm501, %v1546, 0
        %1744 = vmatpush.msra.mxu0 0.0
        %1745 = vmatpush.msra.mxu0 0.0
        %1746 = vmatpush.msra.mxu0 0.0
        %1747 = vmatpush.msra.mxu0 0.0
        %1748 = vmatpush.msra.mxu0 0.0
        %1749 = vmatpush.msra.mxu0 0.0
        %1750 = vmatpush.msra.mxu0 0.0
        %1751 = vmatpush.msra.mxu0 0.0
        %1752 = vmatpush.msra.mxu0 0.0
        %1753 = vmatpush.msra.mxu0 0.0
        %1754 = vmatpush.msra.mxu0 0.0
        %1755 = vmatpush.msra.mxu0 0.0
        %1756 = vmatpush.msra.mxu0 %v1617
        %1757 = vmatpush.msra.mxu0 %v1616
        %1758 = vmatpush.msra.mxu0 %v1615
        %1759 = vmatpush.msra.mxu0 %v1614
        %1760 = vmatmul.f32.gmra.mxu0 %v1742
        %v1761 = vpop.f32.mrf.mxu0
        %v1762 = vadd.f32 0.0, %v1761
        %1763 = vdwg.mxu0
        %v1765 = vsel %vm501, %v1569, 0
        %1767 = vmatpush.msra.mxu0 0.0
        %1768 = vmatpush.msra.mxu0 0.0
        %1769 = vmatpush.msra.mxu0 0.0
        %1770 = vmatpush.msra.mxu0 0.0
        %1771 = vmatpush.msra.mxu0 0.0
        %1772 = vmatpush.msra.mxu0 0.0
        %1773 = vmatpush.msra.mxu0 0.0
        %1774 = vmatpush.msra.mxu0 0.0
        %1775 = vmatpush.msra.mxu0 0.0
        %1776 = vmatpush.msra.mxu0 0.0
        %1777 = vmatpush.msra.mxu0 0.0
        %1778 = vmatpush.msra.mxu0 0.0
        %1779 = vmatpush.msra.mxu0 %v1621
        %1780 = vmatpush.msra.mxu0 %v1620
        %1781 = vmatpush.msra.mxu0 %v1619
        %1782 = vmatpush.msra.mxu0 %v1618
        %1783 = vmatmul.f32.gmra.mxu0 %v1765
        %v1784 = vpop.f32.mrf.mxu0
        %v1785 = vadd.f32 0.0, %v1784
        %1786 = vdwg.mxu0
        %v1788 = vsel %vm501, %v1592, 0
        %1790 = vmatpush.msra.mxu0 0.0
        %1791 = vmatpush.msra.mxu0 0.0
        %1792 = vmatpush.msra.mxu0 0.0
        %1793 = vmatpush.msra.mxu0 0.0
        %1794 = vmatpush.msra.mxu0 0.0
        %1795 = vmatpush.msra.mxu0 0.0
        %1796 = vmatpush.msra.mxu0 0.0
        %1797 = vmatpush.msra.mxu0 0.0
        %1798 = vmatpush.msra.mxu0 0.0
        %1799 = vmatpush.msra.mxu0 0.0
        %1800 = vmatpush.msra.mxu0 0.0
        %1801 = vmatpush.msra.mxu0 0.0
        %1802 = vmatpush.msra.mxu0 %v1625
        %1803 = vmatpush.msra.mxu0 %v1624
        %1804 = vmatpush.msra.mxu0 %v1623
        %1805 = vmatpush.msra.mxu0 %v1622
        %1806 = vmatmul.f32.gmra.mxu0 %v1788
        %v1807 = vpop.f32.mrf.mxu0
        %v1808 = vadd.f32 0.0, %v1807
        %1809 = vdwg.mxu0
        %v1810 = vsel %vm501, %v1647, 0.0
        %v1811 = vsel %vm501, %v1670, 0.0
        %v1812 = vadd.f32 %v1810, %v1811
        %v1813 = vsel %vm501, %v1693, 0.0
        %v1814 = vadd.f32 %v1812, %v1813
        %v1815 = vsel %vm501, %v1716, 0.0
        %v1816 = vadd.f32 %v1814, %v1815
        %v1817 = vsel %vm501, %v1739, 0.0
        %v1818 = vadd.f32 %v1816, %v1817
        %v1819 = vsel %vm501, %v1762, 0.0
        %v1820 = vadd.f32 %v1818, %v1819
        %v1821 = vsel %vm501, %v1785, 0.0
        %v1822 = vadd.f32 %v1820, %v1821
        %v1823 = vsel %vm501, %v1808, 0.0
        %v1824 = vadd.f32 %v1822, %v1823
        %v1825 = vld [vmem:[%s8] sm:$0x1]
        %v1827 = vperm.slane %v1825, 0
        %v1829 = vadd.f32 %v1824, %v1827
        %v1830 = vadd.f32 %v1829, %v436
        %v1831 = vld [vmem:[%s9] sm:$0xff]
        %v1832 = vld [vmem:[%s9 + $0x8] sm:$0xff]
        %v1833 = vld [vmem:[%s9 + $0x10] sm:$0xff]
        %v1834 = vld [vmem:[%s9 + $0x18] sm:$0xff]
        %v1835 = vld [vmem:[%s10] sm:$0x1]
        %v1837 = vperm.slane %v1835, 0
        %v1840 = vsel %vm501, %v1830, 0
        %1842 = vmatpush.msra.mxu0 0.0
        %1843 = vmatpush.msra.mxu0 0.0
        %1844 = vmatpush.msra.mxu0 0.0
        %1845 = vmatpush.msra.mxu0 0.0
        %1846 = vmatpush.msra.mxu0 0.0
        %1847 = vmatpush.msra.mxu0 0.0
        %1848 = vmatpush.msra.mxu0 0.0
        %1849 = vmatpush.msra.mxu0 0.0
        %1850 = vmatpush.msra.mxu0 0.0
        %1851 = vmatpush.msra.mxu0 0.0
        %1852 = vmatpush.msra.mxu0 0.0
        %1853 = vmatpush.msra.mxu0 0.0
        %1854 = vmatpush.msra.mxu0 %v1834
        %1855 = vmatpush.msra.mxu0 %v1833
        %1856 = vmatpush.msra.mxu0 %v1832
        %1857 = vmatpush.msra.mxu0 %v1831
        %1858 = vmatmul.f32.gmra.mxu0 %v1840
        %v1859 = vpop.f32.mrf.mxu0
        %v1860 = vadd.f32 %v1837, %v1859
        %1861 = vdwg.mxu0
        %v1862 = vld [vmem:[%s11] sm:$0xff]
        %v1863 = vld [vmem:[%s11 + $0x8] sm:$0xff]
        %v1864 = vld [vmem:[%s11 + $0x10] sm:$0xff]
        %v1865 = vld [vmem:[%s11 + $0x18] sm:$0xff]
        %v1866 = vld [vmem:[%s11 + $0x20] sm:$0xff]
        %v1867 = vld [vmem:[%s11 + $0x28] sm:$0xff]
        %v1868 = vld [vmem:[%s11 + $0x30] sm:$0xff]
        %v1869 = vld [vmem:[%s11 + $0x38] sm:$0xff]
        %v1870 = vld [vmem:[%s11 + $0x40] sm:$0xff]
        %v1871 = vld [vmem:[%s11 + $0x48] sm:$0xff]
        %v1872 = vld [vmem:[%s11 + $0x50] sm:$0xff]
        %v1873 = vld [vmem:[%s11 + $0x58] sm:$0xff]
        %v1874 = vld [vmem:[%s11 + $0x60] sm:$0xff]
        %v1875 = vld [vmem:[%s11 + $0x68] sm:$0xff]
        %v1876 = vld [vmem:[%s11 + $0x70] sm:$0xff]
        %v1877 = vld [vmem:[%s11 + $0x78] sm:$0xff]
        %v1878 = vld [vmem:[%s12] sm:$0x1]
        %v1880 = vperm.slane %v1878, 0
        %1882 = vmatpush.msra.mxu0 %v1877
        %1883 = vmatpush.msra.mxu0 %v1876
        %1884 = vmatpush.msra.mxu0 %v1875
        %1885 = vmatpush.msra.mxu0 %v1874
        %1886 = vmatpush.msra.mxu0 %v1873
        %1887 = vmatpush.msra.mxu0 %v1872
        %1888 = vmatpush.msra.mxu0 %v1871
        %1889 = vmatpush.msra.mxu0 %v1870
        %1890 = vmatpush.msra.mxu0 %v1869
        %1891 = vmatpush.msra.mxu0 %v1868
        %1892 = vmatpush.msra.mxu0 %v1867
        %1893 = vmatpush.msra.mxu0 %v1866
        %1894 = vmatpush.msra.mxu0 %v1865
        %1895 = vmatpush.msra.mxu0 %v1864
        %1896 = vmatpush.msra.mxu0 %v1863
        %1897 = vmatpush.msra.mxu0 %v1862
        %1898 = vmatmul.f32.gmra.mxu0 %v1860
        %v1899 = vpop.f32.mrf.mxu0
        %v1900 = vadd.f32 %v1880, %v1899
        %1901 = vdwg.mxu0
        %v1902 = vadd.f32 %v1900, %v1830
        %1903 = vst.msk [vmem:[%s431] sm:$0xff] %vm501, %v1902
        %s1904 = sand.u32 %s313, 1
        %s1905 = scalar_lea.sflag [#allocation3], %s1904
        %s1906 = sand.u32 %s313, 1
        %s1907 = smul.addr %s1906, 8
        %s1908 = scalar_lea.vmem [#allocation2], %s1907
        // Predicated region
        $region73: #{transformer_forward.1} parent=71 // pred_check
          %p1909 = pneg %p323
        $region74: #{transformer_forward.1} parent=71 // pred_check_branch
          %1911 = sbr.rel (%p1909) target = $region76
        $region75: #{transformer_forward.1} parent=71 // pred_region
          %1913 = vsyncadd %s1905, 0
          %s1914 = smul.addr %s27, 8
          %s1915 = scalar_lea.hbm %s13, %s1914
          %s1917 = sshll.u32 %s1908, 4
          %s1918 = int_to_ptr.vmem [resolvable:$true] %s1917
          %s1919 = sshll.u32 %s1915, 4
          %s1920 = int_to_ptr.hbm [resolvable:$true] %s1919
          %1922 = dma.vmem_to_hbm [thread:$0]  %s1918, 128, %s1920, %s1905
        $region76: #{transformer_forward.1} parent=71 // pred_fallthru
          _
      $region72: #{transformer_forward.1} parent=5 // pred_fallthru
        _
      %p1923 = scmp.le.s32.totalorder 2, %s22
      // Predicated region
      $region77: #{transformer_forward.1} parent=5 // pred_check
        %p1924 = pneg %p1923
      $region78: #{transformer_forward.1} parent=5 // pred_check_branch
        %1926 = sbr.rel (%p1924) target = $region80
      $region79: #{transformer_forward.1} parent=5 // pred_region
        %s1927 = ssub.s32 %s22, 2
        // Predicated region
        $region81: #{transformer_forward.1} parent=79 // pred_check
          %p1928 = pneg %p329
        $region82: #{transformer_forward.1} parent=79 // pred_check_branch
          %1930 = sbr.rel (%p1928) target = $region84
        $region83: #{transformer_forward.1} parent=79 // pred_region
          %s1931 = sand.u32 %s314, 1
          %s1932 = scalar_lea.sflag [#allocation3], %s1931
          %s1933 = sand.u32 %s314, 1
          %s1934 = smul.addr %s1933, 8
          %s1935 = scalar_lea.vmem [#allocation2], %s1934
          %1937 = dma.done %s1932, 128
        $region84: #{transformer_forward.1} parent=79 // pred_fallthru
          _
      $region80: #{transformer_forward.1} parent=5 // pred_fallthru
        _
    $region6: #{transformer_forward.1} parent=1 // loop_footer
      %s26 = sadd.s32 1, %s22
    $region7: #{transformer_forward.1} parent=1 // loop_footer_branch
      %21 = sbr.rel target = $region3
    $region8: #{transformer_forward.1} parent=1 // loop_exit
      _
    %1938 = vsyncpa [#allocation3], 1
    %s1939 = scalar_lea.sflag [#allocation3], 1
    %1940 = vsyncpa %s1939, 1

</llo_original>
